<compile_context>
chip_gen: v7x
topology: tpu7x:2x2x1
jax: 0.10.0
libtpu: 0.0.40
codegen_flags: <defaults>
</compile_context>

<pallas_src>
from functools import partial

import jax
import jax.numpy as jnp
from jax.experimental import pallas as pl
from jax.experimental.pallas import tpu as pltpu


# --------------------------------------------------------------------------
# Fused kernel: im2col-Conv1d + folded BN + ReLU + BiGRU + Linear(out[:,-1,:])
# --------------------------------------------------------------------------
def fused_cnn_bigru_kernel(xcol_ref, w_ref, b_ref, out_ref,
                           *, T, B, cin, cout, h, nc):
    # xcol_ref : (T*B, 3*Cin) bf16  -- im2col LHS, time-major rows
    # w_ref    : (3*Cin + Cout + 3*H, W) bf16 weight slab, W = max(Cout, 6H, NC)
    #            rows [0,3Cin)      : conv weight (BN folded), cols [0,Cout)
    #            rows [.., +Cout)   : [Wih_f | Wih_b]          cols [0,6H)
    #            rows [.., +H)      : Whh_f                    cols [0,3H)
    #            rows [.., +H)      : Wlin_f                   cols [0,NC)
    #            rows [.., +H)      : Wlin_b                   cols [0,NC)
    # b_ref    : (8, W) f32 bias slab
    #            row 0: conv bias*scale+shift   row 1: [bih_f | bih_b]
    #            row 2: bhh_f                   row 3: bhh_b      row 4: blin
    # out_ref  : (B, NC) f32
    r_conv = 0
    r_ih = 3 * cin
    r_hh = r_ih + cout
    r_lf = r_hh + h
    r_lb = r_lf + h

    xcol = xcol_ref[...]                                        # (T*B, 3Cin)

    # ---- Conv1d(k=3, pad=1) + folded BN + ReLU : ONE im2col matmul ---------
    wconv = w_ref[r_conv:r_ih, 0:cout]                          # (3Cin, Cout)
    y = jnp.dot(xcol, wconv, preferred_element_type=jnp.float32)
    y = jnp.maximum(y + b_ref[0:1, 0:cout], 0.0)                # (T*B, Cout)
    # Dropout(p=0.3) is identity in inference mode (model.eval()).
    yb = y.astype(jnp.bfloat16)

    # ---- Hoisted input-gate projection for BOTH directions (one matmul) ----
    wih_fb = w_ref[r_ih:r_hh, 0:6 * h]                          # (Cout, 6H)
    gx = jnp.dot(yb, wih_fb, preferred_element_type=jnp.float32) \
        + b_ref[1:2, 0:6 * h]                                   # (T*B, 6H)

    # ---- Backward direction --------------------------------------------------
    # out[:, -1, H:] of a bidirectional GRU is the backward cell applied ONLY
    # to timestep T-1 from a zero initial state -> exactly one cell step, and
    # h0 @ Whh_b == 0 so Whh_b is not needed at all.
    gx_b = gx[(T - 1) * B:T * B, 3 * h:6 * h]                   # (B, 3H)
    gh_b = jnp.broadcast_to(b_ref[3:4, 0:3 * h], (B, 3 * h))
    r_b = jax.nn.sigmoid(gx_b[:, 0:h] + gh_b[:, 0:h])
    z_b = jax.nn.sigmoid(gx_b[:, h:2 * h] + gh_b[:, h:2 * h])
    n_b = jnp.tanh(gx_b[:, 2 * h:3 * h] + r_b * gh_b[:, 2 * h:3 * h])
    h_bwd = (1.0 - z_b) * n_b                                   # + z_b * 0
    # Backward half of the Linear issued now -> hides under the forward chain.
    logits = (jnp.dot(h_bwd.astype(jnp.bfloat16), w_ref[r_lb:r_lb + h, 0:nc],
                      preferred_element_type=jnp.float32) + b_ref[4:5, 0:nc])

    # ---- Forward recurrence: one (B,H)x(H,3H) matmul + gate math per step --
    # TODO(synk): hold whh_f staged in the MXU across steps
    # (pltpu.matmul_push_rhs / matmul_acc_lhs / matmul_pop).
    whh_f = w_ref[r_hh:r_lf, 0:3 * h]                           # hoisted load
    bhh_f = jnp.broadcast_to(b_ref[2:3, 0:3 * h], (B, 3 * h))   # hoisted

    h_fwd = jnp.zeros((B, h), jnp.float32)
    for t in range(T):                                          # static unroll
        gx_t = gx[t * B:(t + 1) * B, 0:3 * h]                   # static slice
        gh = jnp.dot(h_fwd.astype(jnp.bfloat16), whh_f,
                     preferred_element_type=jnp.float32) + bhh_f
        r = jax.nn.sigmoid(gx_t[:, 0:h] + gh[:, 0:h])
        z = jax.nn.sigmoid(gx_t[:, h:2 * h] + gh[:, h:2 * h])
        n = jnp.tanh(gx_t[:, 2 * h:3 * h] + r * gh[:, 2 * h:3 * h])
        h_fwd = (1.0 - z) * n + z * h_fwd

    out_ref[...] = logits + jnp.dot(h_fwd.astype(jnp.bfloat16),
                                    w_ref[r_lf:r_lb, 0:nc],
                                    preferred_element_type=jnp.float32)
    # Note: nn.Softmax is defined in __init__ but never applied in forward().


# --------------------------------------------------------------------------
# One-time parameter preparation (hoisted out of the per-call path).
# --------------------------------------------------------------------------
def prepare_params(p):
    cin = p['conv_w'].shape[1]
    cout = p['conv_w'].shape[2]
    h = p['whh_f'].shape[1]
    nc = p['wlin_f'].shape[1]
    W = max(cout, 6 * h, nc)                     # common slab lane width

    # BatchNorm1d (eval) folded into conv weight/bias.
    # TODO(synk): training-mode batch statistics / dropout masking not implemented.
    scale = p['bn_gamma'] / jnp.sqrt(p['bn_var'] + 1e-5)         # (1, Cout)
    shift = p['bn_beta'] - p['bn_mean'] * scale
    wconv = (p['conv_w'] * scale[None]).reshape(3 * cin, cout)   # im2col layout
    bconv = p['conv_b'] * scale + shift

    # Concatenate GRU gate weights (gate order r|z|n): (3,in,H) -> (in, 3H).
    cat_w = lambda w: jnp.transpose(w, (1, 0, 2)).reshape(w.shape[1], 3 * h)
    cat_b = lambda b: jnp.transpose(b, (1, 0, 2)).reshape(1, 3 * h)

    wih_fb = jnp.concatenate([cat_w(p['wih_f']), cat_w(p['wih_b'])], axis=1)
    bih_fb = jnp.concatenate([cat_b(p['bih_f']), cat_b(p['bih_b'])], axis=1)
    whh_f, bhh_f = cat_w(p['whh_f']), cat_b(p['bhh_f'])
    bhh_b = cat_b(p['bhh_b'])                     # whh_b never needed (h0 = 0)

    padw = lambda m: jnp.pad(m, ((0, 0), (0, W - m.shape[1])))

    w_slab = jnp.concatenate(
        [padw(wconv), padw(wih_fb), padw(whh_f),
         padw(p['wlin_f']), padw(p['wlin_b'])], axis=0).astype(jnp.bfloat16)

    b_slab = jnp.concatenate(
        [padw(bconv), padw(bih_fb), padw(bhh_f), padw(bhh_b), padw(p['blin'])],
        axis=0)
    b_slab = jnp.pad(b_slab, ((0, 8 - b_slab.shape[0]), (0, 0))) \
                .astype(jnp.float32)

    return w_slab, b_slab, dict(cout=cout, h=h, nc=nc)


# --------------------------------------------------------------------------
# Per-call wrapper: only x-dependent work (transpose/pad/im2col) + one call.
# --------------------------------------------------------------------------
@partial(jax.jit, static_argnames=("cout", "h", "nc"))
def cnn_bigru_forward(x, w_slab, b_slab, *, cout, h, nc):
    B, T, cin = x.shape

    # Time-major, Conv1d padding=1, im2col (3 shifted slices along features).
    xt = jnp.transpose(x, (1, 0, 2))                          # (T, B, Cin)
    xp = jnp.pad(xt, ((1, 1), (0, 0), (0, 0)))                # (T+2, B, Cin)
    xcol = jnp.concatenate([xp[0:T], xp[1:T + 1], xp[2:T + 2]], axis=-1)
    xcol = xcol.reshape(T * B, 3 * cin).astype(jnp.bfloat16)  # MXU-native LHS

    kernel = partial(fused_cnn_bigru_kernel,
                     T=T, B=B, cin=cin, cout=cout, h=h, nc=nc)
    vmem = pl.BlockSpec(memory_space=pltpu.MemorySpace.VMEM)
    return pl.pallas_call(
        kernel,
        out_shape=jax.ShapeDtypeStruct((B, nc), jnp.float32),
        in_specs=[vmem, vmem, vmem],
        out_specs=vmem,
        compiler_params=pltpu.CompilerParams(
            vmem_limit_bytes=32 * 1024 * 1024),    # safe on v7x's 64 MiB VMEM
    )(xcol, w_slab, b_slab)


# --------------------------------------------------------------------------
# Parameters (PyTorch-equivalent layout, pre-transposed to (in, out)).
# --------------------------------------------------------------------------
def init_params(key, input_size, output_size, units, num_classes):
    ks = jax.random.split(key, 16)
    u = lambda k, shape, b: jax.random.uniform(k, shape, jnp.float32, -b, b)
    cb = 1.0 / (3.0 * input_size) ** 0.5     # conv fan-in bound
    gb = 1.0 / units ** 0.5                  # GRU bound
    lb = 1.0 / (2.0 * units) ** 0.5          # linear bound
    return dict(
        conv_w=u(ks[0], (3, input_size, output_size), cb),      # (k, Cin, Cout)
        conv_b=u(ks[1], (1, output_size), cb),
        bn_gamma=jax.random.uniform(ks[2], (1, output_size), jnp.float32, 0.5, 1.5),
        bn_beta=u(ks[3], (1, output_size), 0.1),
        bn_mean=u(ks[4], (1, output_size), 0.1),
        bn_var=jax.random.uniform(ks[5], (1, output_size), jnp.float32, 0.5, 1.5),
        wih_f=u(ks[6], (3, output_size, units), gb),             # gates r,z,n
        whh_f=u(ks[7], (3, units, units), gb),
        bih_f=u(ks[8], (3, 1, units), gb),
        bhh_f=u(ks[9], (3, 1, units), gb),
        wih_b=u(ks[10], (3, output_size, units), gb),
        whh_b=u(ks[11], (3, units, units), gb),
        bih_b=u(ks[12], (3, 1, units), gb),
        bhh_b=u(ks[13], (3, 1, units), gb),
        wlin_f=u(ks[14], (units, num_classes), lb),
        wlin_b=u(ks[15], (units, num_classes), lb),
        blin=jnp.zeros((1, num_classes), jnp.float32),
    )


def reference_forward(x, p):
    """Pure-JAX f32 reference mirroring the PyTorch forward (eval mode)."""
    B, T, _ = x.shape
    scale = p['bn_gamma'] / jnp.sqrt(p['bn_var'] + 1e-5)
    shift = p['bn_beta'] - p['bn_mean'] * scale
    xpad = jnp.pad(x, ((0, 0), (1, 1), (0, 0)))
    conv = sum(jnp.einsum('btc,cd->btd', xpad[:, k:k + T, :], p['conv_w'][k])
               for k in range(3))
    y = jnp.maximum((conv + p['conv_b']) * scale + shift, 0.0)

    def cell(x_t, hh, wih, whh, bih, bhh):
        r = jax.nn.sigmoid(x_t @ wih[0] + bih[0] + hh @ whh[0] + bhh[0])
        z = jax.nn.sigmoid(x_t @ wih[1] + bih[1] + hh @ whh[1] + bhh[1])
        n = jnp.tanh(x_t @ wih[2] + bih[2] + r * (hh @ whh[2] + bhh[2]))
        return (1.0 - z) * n + z * hh

    H = p['whh_f'].shape[1]
    hf = jnp.zeros((B, H), jnp.float32)
    for t in range(T):
        hf = cell(y[:, t, :], hf, p['wih_f'], p['whh_f'], p['bih_f'], p['bhh_f'])
    hb = cell(y[:, T - 1, :], jnp.zeros((B, H), jnp.float32),
              p['wih_b'], p['whh_b'], p['bih_b'], p['bhh_b'])
    return hf @ p['wlin_f'] + hb @ p['wlin_b'] + p['blin']


if __name__ == "__main__":
    B, T = 2, 8
    input_size, output_size, units, num_classes = 16, 32, 32, 8

    key = jax.random.PRNGKey(0)
    kx, kp = jax.random.split(key)
    x = jax.random.normal(kx, (B, T, input_size), jnp.float32)  # (B, seq, feat)
    params = init_params(kp, input_size, output_size, units, num_classes)

    # One-time parameter prep (hoisted out of the per-call path).
    w_slab, b_slab, dims = prepare_params(params)

    out = jax.block_until_ready(cnn_bigru_forward(x, w_slab, b_slab, **dims))
    assert out.shape == (B, num_classes)

    ref = reference_forward(x, params)
    # bf16 matmul operands (f32 accumulation) vs f32 reference -> looser tol.
    assert jnp.allclose(out, ref, atol=5e-2, rtol=5e-2), "mismatch vs JAX reference"

    print("KERNEL_OK")
</pallas_src>

<mosaic_0001>
module attributes {stable_mosaic.version = 11 : i64} {
  func.func @fused_cnn_bigru_kernel(%arg0: memref<16x48xbf16, #tpu.memory_space<vmem>>, %arg1: memref<176x192xbf16, #tpu.memory_space<vmem>>, %arg2: memref<8x192xf32, #tpu.memory_space<vmem>>, %arg3: memref<2x8xf32, #tpu.memory_space<vmem>>) attributes {dimension_semantics = [], scalar_prefetch = 0 : i64, scratch_operands = 0 : i64, tpu.core_type = #tpu.core_type<tc>} {
    %c0 = arith.constant 0 : index
    %c0_0 = arith.constant 0 : index
    %0 = vector.load %arg0[%c0, %c0_0] : memref<16x48xbf16, #tpu.memory_space<vmem>>, vector<16x48xbf16>
    %c0_1 = arith.constant 0 : index
    %c0_2 = arith.constant 0 : index
    %1 = vector.load %arg1[%c0_1, %c0_2] : memref<176x192xbf16, #tpu.memory_space<vmem>>, vector<48x32xbf16>
    %cst = arith.constant dense<0.000000e+00> : vector<16x32xf32>
    %2 = tpu.matmul %0, %1, %cst {dimension_numbers = #tpu.dot_dimension_numbers<[1], [0], [0], [1], [0, 0, 1, 1], [], []>} : vector<16x48xbf16>, vector<48x32xbf16>, vector<16x32xf32> -> vector<16x32xf32>
    %c0_3 = arith.constant 0 : index
    %c0_4 = arith.constant 0 : index
    %3 = vector.load %arg2[%c0_3, %c0_4] : memref<8x192xf32, #tpu.memory_space<vmem>>, vector<1x32xf32>
    %4 = vector.broadcast %3 : vector<1x32xf32> to vector<16x32xf32>
    %5 = arith.addf %2, %4 : vector<16x32xf32>
    %cst_5 = arith.constant 0.000000e+00 : f32
    %6 = vector.broadcast %cst_5 : f32 to vector<16x32xf32>
    %7 = arith.maximumf %5, %6 : vector<16x32xf32>
    %8 = arith.truncf %7 : vector<16x32xf32> to vector<16x32xbf16>
    %c48 = arith.constant 48 : index
    %c0_6 = arith.constant 0 : index
    %9 = vector.load %arg1[%c48, %c0_6] : memref<176x192xbf16, #tpu.memory_space<vmem>>, vector<32x192xbf16>
    %cst_7 = arith.constant dense<0.000000e+00> : vector<16x192xf32>
    %10 = tpu.matmul %8, %9, %cst_7 {dimension_numbers = #tpu.dot_dimension_numbers<[1], [0], [0], [1], [0, 0, 1, 1], [], []>} : vector<16x32xbf16>, vector<32x192xbf16>, vector<16x192xf32> -> vector<16x192xf32>
    %c1 = arith.constant 1 : index
    %c0_8 = arith.constant 0 : index
    %11 = vector.load %arg2[%c1, %c0_8] : memref<8x192xf32, #tpu.memory_space<vmem>>, vector<1x192xf32>
    %12 = vector.broadcast %11 : vector<1x192xf32> to vector<16x192xf32>
    %13 = arith.addf %10, %12 : vector<16x192xf32>
    %14 = vector.extract_strided_slice %13 {offsets = [14, 96], sizes = [2, 96], strides = [1, 1]} : vector<16x192xf32> to vector<2x96xf32>
    %c3 = arith.constant 3 : index
    %c0_9 = arith.constant 0 : index
    %15 = vector.load %arg2[%c3, %c0_9] : memref<8x192xf32, #tpu.memory_space<vmem>>, vector<1x96xf32>
    %16 = vector.shape_cast %15 : vector<1x96xf32> to vector<1x96xf32>
    %17 = vector.broadcast %16 : vector<1x96xf32> to vector<2x96xf32>
    %18 = vector.extract_strided_slice %14 {offsets = [0, 0], sizes = [2, 32], strides = [1, 1]} : vector<2x96xf32> to vector<2x32xf32>
    %19 = vector.extract_strided_slice %17 {offsets = [0, 0], sizes = [2, 32], strides = [1, 1]} : vector<2x96xf32> to vector<2x32xf32>
    %20 = arith.addf %18, %19 : vector<2x32xf32>
    %21 = arith.negf %20 : vector<2x32xf32>
    %22 = math.exp %21 : vector<2x32xf32>
    %cst_10 = arith.constant 1.000000e+00 : f32
    %23 = vector.broadcast %cst_10 : f32 to vector<2x32xf32>
    %24 = arith.addf %23, %22 : vector<2x32xf32>
    %25 = arith.divf %23, %24 : vector<2x32xf32>
    %26 = vector.extract_strided_slice %14 {offsets = [0, 32], sizes = [2, 32], strides = [1, 1]} : vector<2x96xf32> to vector<2x32xf32>
    %27 = vector.extract_strided_slice %17 {offsets = [0, 32], sizes = [2, 32], strides = [1, 1]} : vector<2x96xf32> to vector<2x32xf32>
    %28 = arith.addf %26, %27 : vector<2x32xf32>
    %29 = arith.negf %28 : vector<2x32xf32>
    %30 = math.exp %29 : vector<2x32xf32>
    %cst_11 = arith.constant 1.000000e+00 : f32
    %31 = vector.broadcast %cst_11 : f32 to vector<2x32xf32>
    %32 = arith.addf %31, %30 : vector<2x32xf32>
    %33 = arith.divf %31, %32 : vector<2x32xf32>
    %34 = vector.extract_strided_slice %14 {offsets = [0, 64], sizes = [2, 32], strides = [1, 1]} : vector<2x96xf32> to vector<2x32xf32>
    %35 = vector.extract_strided_slice %17 {offsets = [0, 64], sizes = [2, 32], strides = [1, 1]} : vector<2x96xf32> to vector<2x32xf32>
    %36 = arith.mulf %25, %35 : vector<2x32xf32>
    %37 = arith.addf %34, %36 : vector<2x32xf32>
    %38 = math.tanh %37 : vector<2x32xf32>
    %cst_12 = arith.constant 1.000000e+00 : f32
    %39 = vector.broadcast %cst_12 : f32 to vector<2x32xf32>
    %40 = arith.subf %39, %33 : vector<2x32xf32>
    %41 = arith.mulf %40, %38 : vector<2x32xf32>
    %42 = arith.truncf %41 : vector<2x32xf32> to vector<2x32xbf16>
    %c144 = arith.constant 144 : index
    %c0_13 = arith.constant 0 : index
    %43 = vector.load %arg1[%c144, %c0_13] : memref<176x192xbf16, #tpu.memory_space<vmem>>, vector<32x8xbf16>
    %cst_14 = arith.constant dense<0.000000e+00> : vector<2x8xf32>
    %44 = tpu.matmul %42, %43, %cst_14 {dimension_numbers = #tpu.dot_dimension_numbers<[1], [0], [0], [1], [0, 0, 1, 1], [], []>} : vector<2x32xbf16>, vector<32x8xbf16>, vector<2x8xf32> -> vector<2x8xf32>
    %c4 = arith.constant 4 : index
    %c0_15 = arith.constant 0 : index
    %45 = vector.load %arg2[%c4, %c0_15] : memref<8x192xf32, #tpu.memory_space<vmem>>, vector<1x8xf32>
    %46 = vector.broadcast %45 : vector<1x8xf32> to vector<2x8xf32>
    %47 = arith.addf %44, %46 : vector<2x8xf32>
    %c80 = arith.constant 80 : index
    %c0_16 = arith.constant 0 : index
    %48 = vector.load %arg1[%c80, %c0_16] : memref<176x192xbf16, #tpu.memory_space<vmem>>, vector<32x96xbf16>
    %c2 = arith.constant 2 : index
    %c0_17 = arith.constant 0 : index
    %49 = vector.load %arg2[%c2, %c0_17] : memref<8x192xf32, #tpu.memory_space<vmem>>, vector<1x96xf32>
    %50 = vector.shape_cast %49 : vector<1x96xf32> to vector<1x96xf32>
    %51 = vector.broadcast %50 : vector<1x96xf32> to vector<2x96xf32>
    %cst_18 = arith.constant 0.000000e+00 : f32
    %52 = vector.broadcast %cst_18 : f32 to vector<2x32xf32>
    %53 = vector.extract_strided_slice %13 {offsets = [0, 0], sizes = [2, 96], strides = [1, 1]} : vector<16x192xf32> to vector<2x96xf32>
    %54 = arith.truncf %52 : vector<2x32xf32> to vector<2x32xbf16>
    %cst_19 = arith.constant dense<0.000000e+00> : vector<2x96xf32>
    %55 = tpu.matmul %54, %48, %cst_19 {dimension_numbers = #tpu.dot_dimension_numbers<[1], [0], [0], [1], [0, 0, 1, 1], [], []>} : vector<2x32xbf16>, vector<32x96xbf16>, vector<2x96xf32> -> vector<2x96xf32>
    %56 = arith.addf %55, %51 : vector<2x96xf32>
    %57 = vector.extract_strided_slice %53 {offsets = [0, 0], sizes = [2, 32], strides = [1, 1]} : vector<2x96xf32> to vector<2x32xf32>
    %58 = vector.extract_strided_slice %56 {offsets = [0, 0], sizes = [2, 32], strides = [1, 1]} : vector<2x96xf32> to vector<2x32xf32>
    %59 = arith.addf %57, %58 : vector<2x32xf32>
    %60 = arith.negf %59 : vector<2x32xf32>
    %61 = math.exp %60 : vector<2x32xf32>
    %cst_20 = arith.constant 1.000000e+00 : f32
    %62 = vector.broadcast %cst_20 : f32 to vector<2x32xf32>
    %63 = arith.addf %62, %61 : vector<2x32xf32>
    %64 = arith.divf %62, %63 : vector<2x32xf32>
    %65 = vector.extract_strided_slice %53 {offsets = [0, 32], sizes = [2, 32], strides = [1, 1]} : vector<2x96xf32> to vector<2x32xf32>
    %66 = vector.extract_strided_slice %56 {offsets = [0, 32], sizes = [2, 32], strides = [1, 1]} : vector<2x96xf32> to vector<2x32xf32>
    %67 = arith.addf %65, %66 : vector<2x32xf32>
    %68 = arith.negf %67 : vector<2x32xf32>
    %69 = math.exp %68 : vector<2x32xf32>
    %cst_21 = arith.constant 1.000000e+00 : f32
    %70 = vector.broadcast %cst_21 : f32 to vector<2x32xf32>
    %71 = arith.addf %70, %69 : vector<2x32xf32>
    %72 = arith.divf %70, %71 : vector<2x32xf32>
    %73 = vector.extract_strided_slice %53 {offsets = [0, 64], sizes = [2, 32], strides = [1, 1]} : vector<2x96xf32> to vector<2x32xf32>
    %74 = vector.extract_strided_slice %56 {offsets = [0, 64], sizes = [2, 32], strides = [1, 1]} : vector<2x96xf32> to vector<2x32xf32>
    %75 = arith.mulf %64, %74 : vector<2x32xf32>
    %76 = arith.addf %73, %75 : vector<2x32xf32>
    %77 = math.tanh %76 : vector<2x32xf32>
    %cst_22 = arith.constant 1.000000e+00 : f32
    %78 = vector.broadcast %cst_22 : f32 to vector<2x32xf32>
    %79 = arith.subf %78, %72 : vector<2x32xf32>
    %80 = arith.mulf %79, %77 : vector<2x32xf32>
    %81 = arith.mulf %72, %52 : vector<2x32xf32>
    %82 = arith.addf %80, %81 : vector<2x32xf32>
    %83 = vector.extract_strided_slice %13 {offsets = [2, 0], sizes = [2, 96], strides = [1, 1]} : vector<16x192xf32> to vector<2x96xf32>
    %84 = arith.truncf %82 : vector<2x32xf32> to vector<2x32xbf16>
    %cst_23 = arith.constant dense<0.000000e+00> : vector<2x96xf32>
    %85 = tpu.matmul %84, %48, %cst_23 {dimension_numbers = #tpu.dot_dimension_numbers<[1], [0], [0], [1], [0, 0, 1, 1], [], []>} : vector<2x32xbf16>, vector<32x96xbf16>, vector<2x96xf32> -> vector<2x96xf32>
    %86 = arith.addf %85, %51 : vector<2x96xf32>
    %87 = vector.extract_strided_slice %83 {offsets = [0, 0], sizes = [2, 32], strides = [1, 1]} : vector<2x96xf32> to vector<2x32xf32>
    %88 = vector.extract_strided_slice %86 {offsets = [0, 0], sizes = [2, 32], strides = [1, 1]} : vector<2x96xf32> to vector<2x32xf32>
    %89 = arith.addf %87, %88 : vector<2x32xf32>
    %90 = arith.negf %89 : vector<2x32xf32>
    %91 = math.exp %90 : vector<2x32xf32>
    %cst_24 = arith.constant 1.000000e+00 : f32
    %92 = vector.broadcast %cst_24 : f32 to vector<2x32xf32>
    %93 = arith.addf %92, %91 : vector<2x32xf32>
    %94 = arith.divf %92, %93 : vector<2x32xf32>
    %95 = vector.extract_strided_slice %83 {offsets = [0, 32], sizes = [2, 32], strides = [1, 1]} : vector<2x96xf32> to vector<2x32xf32>
    %96 = vector.extract_strided_slice %86 {offsets = [0, 32], sizes = [2, 32], strides = [1, 1]} : vector<2x96xf32> to vector<2x32xf32>
    %97 = arith.addf %95, %96 : vector<2x32xf32>
    %98 = arith.negf %97 : vector<2x32xf32>
    %99 = math.exp %98 : vector<2x32xf32>
    %cst_25 = arith.constant 1.000000e+00 : f32
    %100 = vector.broadcast %cst_25 : f32 to vector<2x32xf32>
    %101 = arith.addf %100, %99 : vector<2x32xf32>
    %102 = arith.divf %100, %101 : vector<2x32xf32>
    %103 = vector.extract_strided_slice %83 {offsets = [0, 64], sizes = [2, 32], strides = [1, 1]} : vector<2x96xf32> to vector<2x32xf32>
    %104 = vector.extract_strided_slice %86 {offsets = [0, 64], sizes = [2, 32], strides = [1, 1]} : vector<2x96xf32> to vector<2x32xf32>
    %105 = arith.mulf %94, %104 : vector<2x32xf32>
    %106 = arith.addf %103, %105 : vector<2x32xf32>
    %107 = math.tanh %106 : vector<2x32xf32>
    %cst_26 = arith.constant 1.000000e+00 : f32
    %108 = vector.broadcast %cst_26 : f32 to vector<2x32xf32>
    %109 = arith.subf %108, %102 : vector<2x32xf32>
    %110 = arith.mulf %109, %107 : vector<2x32xf32>
    %111 = arith.mulf %102, %82 : vector<2x32xf32>
    %112 = arith.addf %110, %111 : vector<2x32xf32>
    %113 = vector.extract_strided_slice %13 {offsets = [4, 0], sizes = [2, 96], strides = [1, 1]} : vector<16x192xf32> to vector<2x96xf32>
    %114 = arith.truncf %112 : vector<2x32xf32> to vector<2x32xbf16>
    %cst_27 = arith.constant dense<0.000000e+00> : vector<2x96xf32>
    %115 = tpu.matmul %114, %48, %cst_27 {dimension_numbers = #tpu.dot_dimension_numbers<[1], [0], [0], [1], [0, 0, 1, 1], [], []>} : vector<2x32xbf16>, vector<32x96xbf16>, vector<2x96xf32> -> vector<2x96xf32>
    %116 = arith.addf %115, %51 : vector<2x96xf32>
    %117 = vector.extract_strided_slice %113 {offsets = [0, 0], sizes = [2, 32], strides = [1, 1]} : vector<2x96xf32> to vector<2x32xf32>
    %118 = vector.extract_strided_slice %116 {offsets = [0, 0], sizes = [2, 32], strides = [1, 1]} : vector<2x96xf32> to vector<2x32xf32>
    %119 = arith.addf %117, %118 : vector<2x32xf32>
    %120 = arith.negf %119 : vector<2x32xf32>
    %121 = math.exp %120 : vector<2x32xf32>
    %cst_28 = arith.constant 1.000000e+00 : f32
    %122 = vector.broadcast %cst_28 : f32 to vector<2x32xf32>
    %123 = arith.addf %122, %121 : vector<2x32xf32>
    %124 = arith.divf %122, %123 : vector<2x32xf32>
    %125 = vector.extract_strided_slice %113 {offsets = [0, 32], sizes = [2, 32], strides = [1, 1]} : vector<2x96xf32> to vector<2x32xf32>
    %126 = vector.extract_strided_slice %116 {offsets = [0, 32], sizes = [2, 32], strides = [1, 1]} : vector<2x96xf32> to vector<2x32xf32>
    %127 = arith.addf %125, %126 : vector<2x32xf32>
    %128 = arith.negf %127 : vector<2x32xf32>
    %129 = math.exp %128 : vector<2x32xf32>
    %cst_29 = arith.constant 1.000000e+00 : f32
    %130 = vector.broadcast %cst_29 : f32 to vector<2x32xf32>
    %131 = arith.addf %130, %129 : vector<2x32xf32>
    %132 = arith.divf %130, %131 : vector<2x32xf32>
    %133 = vector.extract_strided_slice %113 {offsets = [0, 64], sizes = [2, 32], strides = [1, 1]} : vector<2x96xf32> to vector<2x32xf32>
    %134 = vector.extract_strided_slice %116 {offsets = [0, 64], sizes = [2, 32], strides = [1, 1]} : vector<2x96xf32> to vector<2x32xf32>
    %135 = arith.mulf %124, %134 : vector<2x32xf32>
    %136 = arith.addf %133, %135 : vector<2x32xf32>
    %137 = math.tanh %136 : vector<2x32xf32>
    %cst_30 = arith.constant 1.000000e+00 : f32
    %138 = vector.broadcast %cst_30 : f32 to vector<2x32xf32>
    %139 = arith.subf %138, %132 : vector<2x32xf32>
    %140 = arith.mulf %139, %137 : vector<2x32xf32>
    %141 = arith.mulf %132, %112 : vector<2x32xf32>
    %142 = arith.addf %140, %141 : vector<2x32xf32>
    %143 = vector.extract_strided_slice %13 {offsets = [6, 0], sizes = [2, 96], strides = [1, 1]} : vector<16x192xf32> to vector<2x96xf32>
    %144 = arith.truncf %142 : vector<2x32xf32> to vector<2x32xbf16>
    %cst_31 = arith.constant dense<0.000000e+00> : vector<2x96xf32>
    %145 = tpu.matmul %144, %48, %cst_31 {dimension_numbers = #tpu.dot_dimension_numbers<[1], [0], [0], [1], [0, 0, 1, 1], [], []>} : vector<2x32xbf16>, vector<32x96xbf16>, vector<2x96xf32> -> vector<2x96xf32>
    %146 = arith.addf %145, %51 : vector<2x96xf32>
    %147 = vector.extract_strided_slice %143 {offsets = [0, 0], sizes = [2, 32], strides = [1, 1]} : vector<2x96xf32> to vector<2x32xf32>
    %148 = vector.extract_strided_slice %146 {offsets = [0, 0], sizes = [2, 32], strides = [1, 1]} : vector<2x96xf32> to vector<2x32xf32>
    %149 = arith.addf %147, %148 : vector<2x32xf32>
    %150 = arith.negf %149 : vector<2x32xf32>
    %151 = math.exp %150 : vector<2x32xf32>
    %cst_32 = arith.constant 1.000000e+00 : f32
    %152 = vector.broadcast %cst_32 : f32 to vector<2x32xf32>
    %153 = arith.addf %152, %151 : vector<2x32xf32>
    %154 = arith.divf %152, %153 : vector<2x32xf32>
    %155 = vector.extract_strided_slice %143 {offsets = [0, 32], sizes = [2, 32], strides = [1, 1]} : vector<2x96xf32> to vector<2x32xf32>
    %156 = vector.extract_strided_slice %146 {offsets = [0, 32], sizes = [2, 32], strides = [1, 1]} : vector<2x96xf32> to vector<2x32xf32>
    %157 = arith.addf %155, %156 : vector<2x32xf32>
    %158 = arith.negf %157 : vector<2x32xf32>
    %159 = math.exp %158 : vector<2x32xf32>
    %cst_33 = arith.constant 1.000000e+00 : f32
    %160 = vector.broadcast %cst_33 : f32 to vector<2x32xf32>
    %161 = arith.addf %160, %159 : vector<2x32xf32>
    %162 = arith.divf %160, %161 : vector<2x32xf32>
    %163 = vector.extract_strided_slice %143 {offsets = [0, 64], sizes = [2, 32], strides = [1, 1]} : vector<2x96xf32> to vector<2x32xf32>
    %164 = vector.extract_strided_slice %146 {offsets = [0, 64], sizes = [2, 32], strides = [1, 1]} : vector<2x96xf32> to vector<2x32xf32>
    %165 = arith.mulf %154, %164 : vector<2x32xf32>
    %166 = arith.addf %163, %165 : vector<2x32xf32>
    %167 = math.tanh %166 : vector<2x32xf32>
    %cst_34 = arith.constant 1.000000e+00 : f32
    %168 = vector.broadcast %cst_34 : f32 to vector<2x32xf32>
    %169 = arith.subf %168, %162 : vector<2x32xf32>
    %170 = arith.mulf %169, %167 : vector<2x32xf32>
    %171 = arith.mulf %162, %142 : vector<2x32xf32>
    %172 = arith.addf %170, %171 : vector<2x32xf32>
    %173 = vector.extract_strided_slice %13 {offsets = [8, 0], sizes = [2, 96], strides = [1, 1]} : vector<16x192xf32> to vector<2x96xf32>
    %174 = arith.truncf %172 : vector<2x32xf32> to vector<2x32xbf16>
    %cst_35 = arith.constant dense<0.000000e+00> : vector<2x96xf32>
    %175 = tpu.matmul %174, %48, %cst_35 {dimension_numbers = #tpu.dot_dimension_numbers<[1], [0], [0], [1], [0, 0, 1, 1], [], []>} : vector<2x32xbf16>, vector<32x96xbf16>, vector<2x96xf32> -> vector<2x96xf32>
    %176 = arith.addf %175, %51 : vector<2x96xf32>
    %177 = vector.extract_strided_slice %173 {offsets = [0, 0], sizes = [2, 32], strides = [1, 1]} : vector<2x96xf32> to vector<2x32xf32>
    %178 = vector.extract_strided_slice %176 {offsets = [0, 0], sizes = [2, 32], strides = [1, 1]} : vector<2x96xf32> to vector<2x32xf32>
    %179 = arith.addf %177, %178 : vector<2x32xf32>
    %180 = arith.negf %179 : vector<2x32xf32>
    %181 = math.exp %180 : vector<2x32xf32>
    %cst_36 = arith.constant 1.000000e+00 : f32
    %182 = vector.broadcast %cst_36 : f32 to vector<2x32xf32>
    %183 = arith.addf %182, %181 : vector<2x32xf32>
    %184 = arith.divf %182, %183 : vector<2x32xf32>
    %185 = vector.extract_strided_slice %173 {offsets = [0, 32], sizes = [2, 32], strides = [1, 1]} : vector<2x96xf32> to vector<2x32xf32>
    %186 = vector.extract_strided_slice %176 {offsets = [0, 32], sizes = [2, 32], strides = [1, 1]} : vector<2x96xf32> to vector<2x32xf32>
    %187 = arith.addf %185, %186 : vector<2x32xf32>
    %188 = arith.negf %187 : vector<2x32xf32>
    %189 = math.exp %188 : vector<2x32xf32>
    %cst_37 = arith.constant 1.000000e+00 : f32
    %190 = vector.broadcast %cst_37 : f32 to vector<2x32xf32>
    %191 = arith.addf %190, %189 : vector<2x32xf32>
    %192 = arith.divf %190, %191 : vector<2x32xf32>
    %193 = vector.extract_strided_slice %173 {offsets = [0, 64], sizes = [2, 32], strides = [1, 1]} : vector<2x96xf32> to vector<2x32xf32>
    %194 = vector.extract_strided_slice %176 {offsets = [0, 64], sizes = [2, 32], strides = [1, 1]} : vector<2x96xf32> to vector<2x32xf32>
    %195 = arith.mulf %184, %194 : vector<2x32xf32>
    %196 = arith.addf %193, %195 : vector<2x32xf32>
    %197 = math.tanh %196 : vector<2x32xf32>
    %cst_38 = arith.constant 1.000000e+00 : f32
    %198 = vector.broadcast %cst_38 : f32 to vector<2x32xf32>
    %199 = arith.subf %198, %192 : vector<2x32xf32>
    %200 = arith.mulf %199, %197 : vector<2x32xf32>
    %201 = arith.mulf %192, %172 : vector<2x32xf32>
    %202 = arith.addf %200, %201 : vector<2x32xf32>
    %203 = vector.extract_strided_slice %13 {offsets = [10, 0], sizes = [2, 96], strides = [1, 1]} : vector<16x192xf32> to vector<2x96xf32>
    %204 = arith.truncf %202 : vector<2x32xf32> to vector<2x32xbf16>
    %cst_39 = arith.constant dense<0.000000e+00> : vector<2x96xf32>
    %205 = tpu.matmul %204, %48, %cst_39 {dimension_numbers = #tpu.dot_dimension_numbers<[1], [0], [0], [1], [0, 0, 1, 1], [], []>} : vector<2x32xbf16>, vector<32x96xbf16>, vector<2x96xf32> -> vector<2x96xf32>
    %206 = arith.addf %205, %51 : vector<2x96xf32>
    %207 = vector.extract_strided_slice %203 {offsets = [0, 0], sizes = [2, 32], strides = [1, 1]} : vector<2x96xf32> to vector<2x32xf32>
    %208 = vector.extract_strided_slice %206 {offsets = [0, 0], sizes = [2, 32], strides = [1, 1]} : vector<2x96xf32> to vector<2x32xf32>
    %209 = arith.addf %207, %208 : vector<2x32xf32>
    %210 = arith.negf %209 : vector<2x32xf32>
    %211 = math.exp %210 : vector<2x32xf32>
    %cst_40 = arith.constant 1.000000e+00 : f32
    %212 = vector.broadcast %cst_40 : f32 to vector<2x32xf32>
    %213 = arith.addf %212, %211 : vector<2x32xf32>
    %214 = arith.divf %212, %213 : vector<2x32xf32>
    %215 = vector.extract_strided_slice %203 {offsets = [0, 32], sizes = [2, 32], strides = [1, 1]} : vector<2x96xf32> to vector<2x32xf32>
    %216 = vector.extract_strided_slice %206 {offsets = [0, 32], sizes = [2, 32], strides = [1, 1]} : vector<2x96xf32> to vector<2x32xf32>
    %217 = arith.addf %215, %216 : vector<2x32xf32>
    %218 = arith.negf %217 : vector<2x32xf32>
    %219 = math.exp %218 : vector<2x32xf32>
    %cst_41 = arith.constant 1.000000e+00 : f32
    %220 = vector.broadcast %cst_41 : f32 to vector<2x32xf32>
    %221 = arith.addf %220, %219 : vector<2x32xf32>
    %222 = arith.divf %220, %221 : vector<2x32xf32>
    %223 = vector.extract_strided_slice %203 {offsets = [0, 64], sizes = [2, 32], strides = [1, 1]} : vector<2x96xf32> to vector<2x32xf32>
    %224 = vector.extract_strided_slice %206 {offsets = [0, 64], sizes = [2, 32], strides = [1, 1]} : vector<2x96xf32> to vector<2x32xf32>
    %225 = arith.mulf %214, %224 : vector<2x32xf32>
    %226 = arith.addf %223, %225 : vector<2x32xf32>
    %227 = math.tanh %226 : vector<2x32xf32>
    %cst_42 = arith.constant 1.000000e+00 : f32
    %228 = vector.broadcast %cst_42 : f32 to vector<2x32xf32>
    %229 = arith.subf %228, %222 : vector<2x32xf32>
    %230 = arith.mulf %229, %227 : vector<2x32xf32>
    %231 = arith.mulf %222, %202 : vector<2x32xf32>
    %232 = arith.addf %230, %231 : vector<2x32xf32>
    %233 = vector.extract_strided_slice %13 {offsets = [12, 0], sizes = [2, 96], strides = [1, 1]} : vector<16x192xf32> to vector<2x96xf32>
    %234 = arith.truncf %232 : vector<2x32xf32> to vector<2x32xbf16>
    %cst_43 = arith.constant dense<0.000000e+00> : vector<2x96xf32>
    %235 = tpu.matmul %234, %48, %cst_43 {dimension_numbers = #tpu.dot_dimension_numbers<[1], [0], [0], [1], [0, 0, 1, 1], [], []>} : vector<2x32xbf16>, vector<32x96xbf16>, vector<2x96xf32> -> vector<2x96xf32>
    %236 = arith.addf %235, %51 : vector<2x96xf32>
    %237 = vector.extract_strided_slice %233 {offsets = [0, 0], sizes = [2, 32], strides = [1, 1]} : vector<2x96xf32> to vector<2x32xf32>
    %238 = vector.extract_strided_slice %236 {offsets = [0, 0], sizes = [2, 32], strides = [1, 1]} : vector<2x96xf32> to vector<2x32xf32>
    %239 = arith.addf %237, %238 : vector<2x32xf32>
    %240 = arith.negf %239 : vector<2x32xf32>
    %241 = math.exp %240 : vector<2x32xf32>
    %cst_44 = arith.constant 1.000000e+00 : f32
    %242 = vector.broadcast %cst_44 : f32 to vector<2x32xf32>
    %243 = arith.addf %242, %241 : vector<2x32xf32>
    %244 = arith.divf %242, %243 : vector<2x32xf32>
    %245 = vector.extract_strided_slice %233 {offsets = [0, 32], sizes = [2, 32], strides = [1, 1]} : vector<2x96xf32> to vector<2x32xf32>
    %246 = vector.extract_strided_slice %236 {offsets = [0, 32], sizes = [2, 32], strides = [1, 1]} : vector<2x96xf32> to vector<2x32xf32>
    %247 = arith.addf %245, %246 : vector<2x32xf32>
    %248 = arith.negf %247 : vector<2x32xf32>
    %249 = math.exp %248 : vector<2x32xf32>
    %cst_45 = arith.constant 1.000000e+00 : f32
    %250 = vector.broadcast %cst_45 : f32 to vector<2x32xf32>
    %251 = arith.addf %250, %249 : vector<2x32xf32>
    %252 = arith.divf %250, %251 : vector<2x32xf32>
    %253 = vector.extract_strided_slice %233 {offsets = [0, 64], sizes = [2, 32], strides = [1, 1]} : vector<2x96xf32> to vector<2x32xf32>
    %254 = vector.extract_strided_slice %236 {offsets = [0, 64], sizes = [2, 32], strides = [1, 1]} : vector<2x96xf32> to vector<2x32xf32>
    %255 = arith.mulf %244, %254 : vector<2x32xf32>
    %256 = arith.addf %253, %255 : vector<2x32xf32>
    %257 = math.tanh %256 : vector<2x32xf32>
    %cst_46 = arith.constant 1.000000e+00 : f32
    %258 = vector.broadcast %cst_46 : f32 to vector<2x32xf32>
    %259 = arith.subf %258, %252 : vector<2x32xf32>
    %260 = arith.mulf %259, %257 : vector<2x32xf32>
    %261 = arith.mulf %252, %232 : vector<2x32xf32>
    %262 = arith.addf %260, %261 : vector<2x32xf32>
    %263 = vector.extract_strided_slice %13 {offsets = [14, 0], sizes = [2, 96], strides = [1, 1]} : vector<16x192xf32> to vector<2x96xf32>
    %264 = arith.truncf %262 : vector<2x32xf32> to vector<2x32xbf16>
    %cst_47 = arith.constant dense<0.000000e+00> : vector<2x96xf32>
    %265 = tpu.matmul %264, %48, %cst_47 {dimension_numbers = #tpu.dot_dimension_numbers<[1], [0], [0], [1], [0, 0, 1, 1], [], []>} : vector<2x32xbf16>, vector<32x96xbf16>, vector<2x96xf32> -> vector<2x96xf32>
    %266 = arith.addf %265, %51 : vector<2x96xf32>
    %267 = vector.extract_strided_slice %263 {offsets = [0, 0], sizes = [2, 32], strides = [1, 1]} : vector<2x96xf32> to vector<2x32xf32>
    %268 = vector.extract_strided_slice %266 {offsets = [0, 0], sizes = [2, 32], strides = [1, 1]} : vector<2x96xf32> to vector<2x32xf32>
    %269 = arith.addf %267, %268 : vector<2x32xf32>
    %270 = arith.negf %269 : vector<2x32xf32>
    %271 = math.exp %270 : vector<2x32xf32>
    %cst_48 = arith.constant 1.000000e+00 : f32
    %272 = vector.broadcast %cst_48 : f32 to vector<2x32xf32>
    %273 = arith.addf %272, %271 : vector<2x32xf32>
    %274 = arith.divf %272, %273 : vector<2x32xf32>
    %275 = vector.extract_strided_slice %263 {offsets = [0, 32], sizes = [2, 32], strides = [1, 1]} : vector<2x96xf32> to vector<2x32xf32>
    %276 = vector.extract_strided_slice %266 {offsets = [0, 32], sizes = [2, 32], strides = [1, 1]} : vector<2x96xf32> to vector<2x32xf32>
    %277 = arith.addf %275, %276 : vector<2x32xf32>
    %278 = arith.negf %277 : vector<2x32xf32>
    %279 = math.exp %278 : vector<2x32xf32>
    %cst_49 = arith.constant 1.000000e+00 : f32
    %280 = vector.broadcast %cst_49 : f32 to vector<2x32xf32>
    %281 = arith.addf %280, %279 : vector<2x32xf32>
    %282 = arith.divf %280, %281 : vector<2x32xf32>
    %283 = vector.extract_strided_slice %263 {offsets = [0, 64], sizes = [2, 32], strides = [1, 1]} : vector<2x96xf32> to vector<2x32xf32>
    %284 = vector.extract_strided_slice %266 {offsets = [0, 64], sizes = [2, 32], strides = [1, 1]} : vector<2x96xf32> to vector<2x32xf32>
    %285 = arith.mulf %274, %284 : vector<2x32xf32>
    %286 = arith.addf %283, %285 : vector<2x32xf32>
    %287 = math.tanh %286 : vector<2x32xf32>
    %cst_50 = arith.constant 1.000000e+00 : f32
    %288 = vector.broadcast %cst_50 : f32 to vector<2x32xf32>
    %289 = arith.subf %288, %282 : vector<2x32xf32>
    %290 = arith.mulf %289, %287 : vector<2x32xf32>
    %291 = arith.mulf %282, %262 : vector<2x32xf32>
    %292 = arith.addf %290, %291 : vector<2x32xf32>
    %293 = arith.truncf %292 : vector<2x32xf32> to vector<2x32xbf16>
    %c112 = arith.constant 112 : index
    %c0_51 = arith.constant 0 : index
    %294 = vector.load %arg1[%c112, %c0_51] : memref<176x192xbf16, #tpu.memory_space<vmem>>, vector<32x8xbf16>
    %cst_52 = arith.constant dense<0.000000e+00> : vector<2x8xf32>
    %295 = tpu.matmul %293, %294, %cst_52 {dimension_numbers = #tpu.dot_dimension_numbers<[1], [0], [0], [1], [0, 0, 1, 1], [], []>} : vector<2x32xbf16>, vector<32x8xbf16>, vector<2x8xf32> -> vector<2x8xf32>
    %296 = arith.addf %47, %295 : vector<2x8xf32>
    %c0_53 = arith.constant 0 : index
    %c0_54 = arith.constant 0 : index
    %297 = vector.load %arg3[%c0_53, %c0_54] : memref<2x8xf32, #tpu.memory_space<vmem>>, vector<2x8xf32>
    tpu.vector_store %arg3[%c0_53, %c0_54], %296 {strides = array<i32>} : memref<2x8xf32, #tpu.memory_space<vmem>>, vector<2x8xf32>,
    return
  }
}

</mosaic_0001>

<llo_original>
// kernel: cnn_bigru_forward.1
$region0: #{cnn_bigru_forward.1}
  #allocation0 [shape = 'u32[]', space=smem, size = 0x4, offset = 0x4, fixed_abs, tag = 'smem constant byte address 0x4 - core index']
  #allocation1 [shape = 'u32[144,128]{1,0:T(1,128)}', space=vmem, size = 0x12000, scoped, tag = 'internal scratch']
  %s0 = inlined_call_operand.vmem [shape: bf16[16,48], index: 0, kind: input, shape index: {}]
  %s1 = inlined_call_operand.hbm [shape: bf16[176,192], index: 1, kind: input, shape index: {}]
  %s2 = inlined_call_operand.vmem [shape: f32[8,192], index: 2, kind: input, shape index: {}]
  %s3 = inlined_call_operand.hbm [shape: f32[2,8], index: 3, kind: output, shape index: {}]
  %s4 = sld [smem:[#allocation0]]
  $region26: #{cnn_bigru_forward.1} parent=0
    _
  %s6 = ssub.s32 1, %s4
  %s7 = scalar_select 0, %s6, %s4
  $region1: #{cnn_bigru_forward.1} parent=0
    #allocation2 [shape = 'u8[90112]{0}', space=vmem, size = 0x16000, scoped, tag = 'input window, operand 1, single buffered']
    #allocation3 [shape = 's32[1]{0}', space=sflag, size = 0x4, scoped, tag = 'scoped memory for cnn_bigru_forward.1']
    #allocation4 [shape = 's32[1]{0}', space=sflag, size = 0x4, scoped, tag = 'scoped memory for cnn_bigru_forward.1']
    #allocation5 [shape = 'u8[1024]{0}', space=vmem, size = 0x400, scoped, tag = 'output window, operand 0, single buffered']
    %8 = vsyncpa [#allocation3], 0
    %9 = vsyncpa [#allocation4], 0
    // Predicated region
    $region2: #{cnn_bigru_forward.1} parent=1 // pred_check
      _
    $region3: #{cnn_bigru_forward.1} parent=1 // pred_check_branch
      %11 = sbr.rel (0) target = $region5
    $region4: #{cnn_bigru_forward.1} parent=1 // pred_region
      _
    $region5: #{cnn_bigru_forward.1} parent=1 // pred_fallthru
      _
    // Predicated region
    $region6: #{cnn_bigru_forward.1} parent=1 // pred_check
      _
    $region7: #{cnn_bigru_forward.1} parent=1 // pred_check_branch
      %13 = sbr.rel (0) target = $region9
    $region8: #{cnn_bigru_forward.1} parent=1 // pred_region
      %s15 = ssub.s32 2816, 2816
      %16 = vsyncadd [#allocation3], %s15
      %s17 = sshll.u32 [#allocation2], 4
      %s18 = int_to_ptr.vmem [resolvable:$true] %s17
      %23 = dma.hbm_to_vmem [thread:$0]  %s1, 2816, %s18, [#allocation3], 128, 128, 8
    $region9: #{cnn_bigru_forward.1} parent=1 // pred_fallthru
      _
    // Predicated region
    $region10: #{cnn_bigru_forward.1} parent=1 // pred_check
      _
    $region11: #{cnn_bigru_forward.1} parent=1 // pred_check_branch
      %25 = sbr.rel (0) target = $region13
    $region12: #{cnn_bigru_forward.1} parent=1 // pred_region
      _
    $region13: #{cnn_bigru_forward.1} parent=1 // pred_fallthru
      _
    // Predicated region
    $region14: #{cnn_bigru_forward.1} parent=1 // pred_check
      _
    $region15: #{cnn_bigru_forward.1} parent=1 // pred_check_branch
      %27 = sbr.rel (0) target = $region17
    $region16: #{cnn_bigru_forward.1} parent=1 // pred_region
      %28 = dma.done [#allocation3], 2816
    $region17: #{cnn_bigru_forward.1} parent=1 // pred_fallthru
      _
    %v30 = vld [vmem:[%s0] sm:$0xf]
    %v31 = vld [vmem:[%s0 + $0x4] sm:$0xf]
    %v32 = vld [vmem:[#allocation2] sm:$0xf]
    %v33 = vld [vmem:[#allocation2 + $0x8] sm:$0xf]
    %v34 = vld [vmem:[#allocation2 + $0x10] sm:$0xf]
    %v35 = vld [vmem:[#allocation2 + $0x18] sm:$0xf]
    %v36 = vld [vmem:[#allocation2 + $0x20] sm:$0xf]
    %v37 = vld [vmem:[#allocation2 + $0x28] sm:$0xf]
    %v38 = vld [vmem:[%s2] ss:$0 sm:$0xff]
    %v41 = vunpack.c.l.b16 %v30
    %v42 = vunpack.c.l.b16 %v31
    %v43 = vpack.c.b16 %v42, %v41
    %v50 = vunpack.c.l.b16 %v32
    %v51 = vunpack.c.l.b16 %v33
    %v52 = vunpack.c.l.b16 %v34
    %v53 = vunpack.c.l.b16 %v35
    %v54 = vunpack.c.l.b16 %v36
    %v55 = vunpack.c.l.b16 %v37
    %v56 = vpack.c.b16 %v51, %v50
    %v57 = vpack.c.b16 %v53, %v52
    %v58 = vpack.c.b16 %v55, %v54
    %vm62 = vcmask 392192
    %v64 = vsel %vm62, %v43, 0
    %66 = vmatprep.subr.bf16.mxu0 0
    %67 = vmatpush1.bf16.msra.mxu0 %v56
    %68 = vmatprep.subr.bf16.mxu0 0
    %69 = vmatpush1.bf16.msra.mxu0 %v57
    %70 = vmatprep.subr.bf16.mxu0 0
    %71 = vmatpush1.bf16.msra.mxu0 %v58
    %72 = vmatprep.subr.bf16.mxu0 0
    %73 = vmatpush1.bf16.msra.mxu0 0
    %74 = vmatprep.subr.bf16.mxu0 0
    %75 = vmatpush1.bf16.msra.mxu0 0
    %76 = vmatprep.subr.bf16.mxu0 0
    %77 = vmatpush1.bf16.msra.mxu0 0
    %78 = vmatprep.subr.bf16.mxu0 0
    %79 = vmatpush1.bf16.msra.mxu0 0
    %80 = vmatprep.subr.bf16.mxu0 0
    %81 = vmatpush1.bf16.msra.mxu0 0
    %82 = vmatprep.subr.bf16.mxu0 0
    %83 = vmatpush1.bf16.msra.mxu0 0
    %84 = vmatprep.subr.bf16.mxu0 0
    %85 = vmatpush1.bf16.msra.mxu0 0
    %86 = vmatprep.subr.bf16.mxu0 0
    %87 = vmatpush1.bf16.msra.mxu0 0
    %88 = vmatprep.subr.bf16.mxu0 0
    %89 = vmatpush1.bf16.msra.mxu0 0
    %90 = vmatprep.subr.bf16.mxu0 0
    %91 = vmatpush1.bf16.msra.mxu0 0
    %92 = vmatprep.subr.bf16.mxu0 0
    %93 = vmatpush1.bf16.msra.mxu0 0
    %94 = vmatprep.subr.bf16.mxu0 0
    %95 = vmatpush1.bf16.msra.mxu0 0
    %96 = vmatprep.subr.bf16.mxu0 0
    %97 = vmatpush1.bf16.msra.mxu0 0
    %98 = vmatprep.mubr.bf16.mxu0 0
    %99 = vmatmul.mubr.bf16.gmra.mrb[0].mxu0 %v64
    %v100 = vpop.f32.mrb[0].mxu0
    %v101 = vadd.f32 %v38, %v100
    %v102 = vpop.f32.mrb[0].mxu0
    %v103 = vpop.f32.mrb[0].mxu0
    %v104 = vadd.f32 %v38, %v103
    %v105 = vpop.f32.mrb[0].mxu0
    %106 = vdwg.mxu0
    %v107 = vmax.f32 %v101, 0.0
    %v108 = vmax.f32 %v104, 0.0
    %v109 = vpack.c.bf16 %v108, %v107
    %v110 = vld [vmem:[#allocation2 + $0x30] sm:$0xff]
    %v111 = vld [vmem:[#allocation2 + $0x38] sm:$0xff]
    %v112 = vld [vmem:[#allocation2 + $0x40] sm:$0xff]
    %v113 = vld [vmem:[#allocation2 + $0x48] sm:$0xff]
    %s114 = scalar_lea.vmem %s2, 1
    %v115 = vld [vmem:[%s114] ss:$8 sm:$0x3]
    %v117 = vlaneseq
    %v118 = vshrl.u32 %v117, 7
    %v119 = vsub.s32 0, %v118
    %v120 = vrot.slane %v115, %v119
    %v121 = vlaneseq
    %v122 = vshrl.u32 %v121, 7
    %v123 = vsub.s32 1, %v122
    %v124 = vrot.slane %v115, %v123
    %v131 = vunpack.c.l.b16 %v110
    %v132 = vunpack.c.h.b16 %v110
    %v133 = vunpack.c.l.b16 %v111
    %v134 = vunpack.c.h.b16 %v111
    %v135 = vunpack.c.l.b16 %v112
    %v136 = vunpack.c.h.b16 %v112
    %v137 = vunpack.c.l.b16 %v113
    %v138 = vunpack.c.h.b16 %v113
    %v139 = vpack.c.b16 %v133, %v131
    %v140 = vpack.c.b16 %v134, %v132
    %v141 = vpack.c.b16 %v137, %v135
    %v142 = vpack.c.b16 %v138, %v136
    %vm147 = vcmask 261120
    %v149 = vsel %vm147, %v109, 0
    %151 = vmatprep.subr.bf16.mxu0 %v140
    %152 = vmatpush1.bf16.msra.mxu0 %v139
    %153 = vmatprep.subr.bf16.mxu0 %v142
    %154 = vmatpush1.bf16.msra.mxu0 %v141
    %155 = vmatprep.subr.bf16.mxu0 0
    %156 = vmatpush1.bf16.msra.mxu0 0
    %157 = vmatprep.subr.bf16.mxu0 0
    %158 = vmatpush1.bf16.msra.mxu0 0
    %159 = vmatprep.subr.bf16.mxu0 0
    %160 = vmatpush1.bf16.msra.mxu0 0
    %161 = vmatprep.subr.bf16.mxu0 0
    %162 = vmatpush1.bf16.msra.mxu0 0
    %163 = vmatprep.subr.bf16.mxu0 0
    %164 = vmatpush1.bf16.msra.mxu0 0
    %165 = vmatprep.subr.bf16.mxu0 0
    %166 = vmatpush1.bf16.msra.mxu0 0
    %167 = vmatprep.subr.bf16.mxu0 0
    %168 = vmatpush1.bf16.msra.mxu0 0
    %169 = vmatprep.subr.bf16.mxu0 0
    %170 = vmatpush1.bf16.msra.mxu0 0
    %171 = vmatprep.subr.bf16.mxu0 0
    %172 = vmatpush1.bf16.msra.mxu0 0
    %173 = vmatprep.subr.bf16.mxu0 0
    %174 = vmatpush1.bf16.msra.mxu0 0
    %175 = vmatprep.subr.bf16.mxu0 0
    %176 = vmatpush1.bf16.msra.mxu0 0
    %177 = vmatprep.subr.bf16.mxu0 0
    %178 = vmatpush1.bf16.msra.mxu0 0
    %179 = vmatprep.subr.bf16.mxu0 0
    %180 = vmatpush1.bf16.msra.mxu0 0
    %181 = vmatprep.subr.bf16.mxu0 0
    %182 = vmatpush1.bf16.msra.mxu0 0
    %183 = vmatprep.mubr.bf16.mxu0 0
    %184 = vmatmul.mubr.bf16.gmra.mrb[0].mxu0 %v149
    %v185 = vpop.f32.mrb[0].mxu0
    %v186 = vadd.f32 %v120, %v185
    %v187 = vpop.f32.mrb[0].mxu0
    %v188 = vpop.f32.mrb[0].mxu0
    %v189 = vadd.f32 %v120, %v188
    %v190 = vpop.f32.mrb[0].mxu0
    %v191 = vadd.f32 %v124, %v190
    %192 = vdwg.mxu0
    %v193 = vld [vmem:[%s2 + $0x3] ss:$0 sm:$0xff]
    %195 = vrot.lane.b32.xlu0 %v193, 96
    %v196 = vpop.permute.xlu0 %195
    %v198 = vadd.f32 %v189, %v196
    %v199 = vxor.u32 %v198, 2147483648
    %v200 = vmul.f32 %v199, 1.442695
    %v201 = vpow.pop %v200
    %v202 = vadd.f32 %v201, 1.0
    %v203 = vrcp.pop %v202
    %v204 = vmul.f32 1.0, %v203
    %v205 = vadd.f32 %v191, %v196
    %v206 = vxor.u32 %v205, 2147483648
    %v207 = vmul.f32 %v206, 1.442695
    %v208 = vpow.pop %v207
    %v209 = vadd.f32 %v208, 1.0
    %v210 = vrcp.pop %v209
    %v211 = vmul.f32 1.0, %v210
    %212 = vrot.lane.b32.xlu0 %v193, 32
    %v213 = vpop.permute.xlu0 %212
    %v215 = vmul.f32 %v204, %v213
    %217 = vrot.lane.b32.xlu0 %v215, 64
    %v218 = vpop.permute.xlu0 %217
    %v220 = vadd.f32 %v191, %v218
    %v221 = vtanh.pop %v220
    %v222 = vsub.f32 1.0, %v211
    %224 = vrot.lane.b32.xlu0 %v221, 96
    %v225 = vpop.permute.xlu0 %224
    %v227 = vmul.f32 %v222, %v225
    %v228 = vpack.c.bf16 %v227, %v227
    %v229 = vld [vmem:[#allocation2 + $0x90] sm:$0xf]
    %v230 = vld [vmem:[#allocation2 + $0x98] sm:$0xf]
    %v231 = vld [vmem:[#allocation2 + $0xa0] sm:$0xf]
    %v232 = vld [vmem:[#allocation2 + $0xa8] sm:$0xf]
    %v233 = vld [vmem:[%s2 + $0x4] ss:$0 sm:$0xff]
    %v235 = vrot.slane %v228, 3
    %v240 = vunpack.c.l.b16 %v229
    %v241 = vunpack.c.l.b16 %v230
    %v242 = vunpack.c.l.b16 %v231
    %v243 = vunpack.c.l.b16 %v232
    %v244 = vpack.c.b16 %v241, %v240
    %v245 = vpack.c.b16 %v243, %v242
    %v249 = vsel %vm147, %v235, 0
    %251 = vmatprep.subr.bf16.mxu0 0
    %252 = vmatpush1.bf16.msra.mxu0 %v244
    %253 = vmatprep.subr.bf16.mxu0 0
    %254 = vmatpush1.bf16.msra.mxu0 %v245
    %255 = vmatprep.subr.bf16.mxu0 0
    %256 = vmatpush1.bf16.msra.mxu0 0
    %257 = vmatprep.subr.bf16.mxu0 0
    %258 = vmatpush1.bf16.msra.mxu0 0
    %259 = vmatprep.subr.bf16.mxu0 0
    %260 = vmatpush1.bf16.msra.mxu0 0
    %261 = vmatprep.subr.bf16.mxu0 0
    %262 = vmatpush1.bf16.msra.mxu0 0
    %263 = vmatprep.subr.bf16.mxu0 0
    %264 = vmatpush1.bf16.msra.mxu0 0
    %265 = vmatprep.subr.bf16.mxu0 0
    %266 = vmatpush1.bf16.msra.mxu0 0
    %267 = vmatprep.subr.bf16.mxu0 0
    %268 = vmatpush1.bf16.msra.mxu0 0
    %269 = vmatprep.subr.bf16.mxu0 0
    %270 = vmatpush1.bf16.msra.mxu0 0
    %271 = vmatprep.subr.bf16.mxu0 0
    %272 = vmatpush1.bf16.msra.mxu0 0
    %273 = vmatprep.subr.bf16.mxu0 0
    %274 = vmatpush1.bf16.msra.mxu0 0
    %275 = vmatprep.subr.bf16.mxu0 0
    %276 = vmatpush1.bf16.msra.mxu0 0
    %277 = vmatprep.subr.bf16.mxu0 0
    %278 = vmatpush1.bf16.msra.mxu0 0
    %279 = vmatprep.subr.bf16.mxu0 0
    %280 = vmatpush1.bf16.msra.mxu0 0
    %281 = vmatprep.subr.bf16.mxu0 0
    %282 = vmatpush1.bf16.msra.mxu0 0
    %283 = vmatprep.mubr.bf16.mxu0 0
    %284 = vmatmul.mubr.bf16.gmra.mrb[0].mxu0 %v249
    %v285 = vpop.f32.mrb[0].mxu0
    %v286 = vadd.f32 %v233, %v285
    %v287 = vpop.f32.mrb[0].mxu0
    %v288 = vpop.f32.mrb[0].mxu0
    %v289 = vpop.f32.mrb[0].mxu0
    %290 = vdwg.mxu0
    %v291 = vld [vmem:[#allocation2 + $0x50] sm:$0xf]
    %v292 = vld [vmem:[#allocation2 + $0x58] sm:$0xf]
    %v293 = vld [vmem:[#allocation2 + $0x60] sm:$0xf]
    %v294 = vld [vmem:[#allocation2 + $0x68] sm:$0xf]
    %v295 = vld [vmem:[%s2 + $0x2] ss:$0 sm:$0xff]
    %v300 = vunpack.c.l.b16 %v291
    %v301 = vunpack.c.l.b16 %v292
    %v302 = vunpack.c.l.b16 %v293
    %v303 = vunpack.c.l.b16 %v294
    %v304 = vpack.c.b16 %v301, %v300
    %v305 = vpack.c.b16 %v303, %v302
    %v309 = vsel %vm147, 0, 0
    %311 = vmatprep.subr.bf16.mxu0 0
    %312 = vmatpush1.bf16.msra.mxu0 %v304
    %313 = vmatprep.subr.bf16.mxu0 0
    %314 = vmatpush1.bf16.msra.mxu0 %v305
    %315 = vmatprep.subr.bf16.mxu0 0
    %316 = vmatpush1.bf16.msra.mxu0 0
    %317 = vmatprep.subr.bf16.mxu0 0
    %318 = vmatpush1.bf16.msra.mxu0 0
    %319 = vmatprep.subr.bf16.mxu0 0
    %320 = vmatpush1.bf16.msra.mxu0 0
    %321 = vmatprep.subr.bf16.mxu0 0
    %322 = vmatpush1.bf16.msra.mxu0 0
    %323 = vmatprep.subr.bf16.mxu0 0
    %324 = vmatpush1.bf16.msra.mxu0 0
    %325 = vmatprep.subr.bf16.mxu0 0
    %326 = vmatpush1.bf16.msra.mxu0 0
    %327 = vmatprep.subr.bf16.mxu0 0
    %328 = vmatpush1.bf16.msra.mxu0 0
    %329 = vmatprep.subr.bf16.mxu0 0
    %330 = vmatpush1.bf16.msra.mxu0 0
    %331 = vmatprep.subr.bf16.mxu0 0
    %332 = vmatpush1.bf16.msra.mxu0 0
    %333 = vmatprep.subr.bf16.mxu0 0
    %334 = vmatpush1.bf16.msra.mxu0 0
    %335 = vmatprep.subr.bf16.mxu0 0
    %336 = vmatpush1.bf16.msra.mxu0 0
    %337 = vmatprep.subr.bf16.mxu0 0
    %338 = vmatpush1.bf16.msra.mxu0 0
    %339 = vmatprep.subr.bf16.mxu0 0
    %340 = vmatpush1.bf16.msra.mxu0 0
    %341 = vmatprep.subr.bf16.mxu0 0
    %342 = vmatpush1.bf16.msra.mxu0 0
    %343 = vmatprep.mubr.bf16.mxu0 0
    %344 = vmatmul.mubr.bf16.gmra.mrb[0].mxu0 %v309
    %v345 = vpop.f32.mrb[0].mxu0
    %v346 = vadd.f32 %v295, %v345
    %v347 = vpop.f32.mrb[0].mxu0
    %v348 = vpop.f32.mrb[0].mxu0
    %v349 = vpop.f32.mrb[0].mxu0
    %350 = vdwg.mxu0
    %v351 = vadd.f32 %v186, %v346
    %v352 = vxor.u32 %v351, 2147483648
    %v353 = vmul.f32 %v352, 1.442695
    %v354 = vpow.pop %v353
    %v355 = vadd.f32 %v354, 1.0
    %v356 = vrcp.pop %v355
    %v357 = vmul.f32 1.0, %v356
    %359 = vrot.lane.b32.xlu0 %v346, 64
    %v360 = vpop.permute.xlu0 %359
    %v362 = vmul.f32 %v357, %v360
    %364 = vrot.lane.b32.xlu0 %v362, 64
    %v365 = vpop.permute.xlu0 %364
    %v367 = vadd.f32 %v186, %v365
    %v368 = vtanh.pop %v367
    %v369 = vsub.f32 1.0, %v357
    %371 = vrot.lane.b32.xlu0 %v368, 96
    %v372 = vpop.permute.xlu0 %371
    %v374 = vmul.f32 %v369, %v372
    %v375 = vmul.f32 %v357, 0.0
    %v376 = vadd.f32 %v374, %v375
    %v377 = vpack.c.bf16 %v376, %v376
    %379 = vrot.lane.b32.xlu0 %v377, 96
    %v380 = vpop.permute.xlu0 %379
    %v382 = vsel %vm147, %v380, 0
    %384 = vmatprep.subr.bf16.mxu0 0
    %385 = vmatpush1.bf16.msra.mxu0 %v304
    %386 = vmatprep.subr.bf16.mxu0 0
    %387 = vmatpush1.bf16.msra.mxu0 %v305
    %388 = vmatprep.subr.bf16.mxu0 0
    %389 = vmatpush1.bf16.msra.mxu0 0
    %390 = vmatprep.subr.bf16.mxu0 0
    %391 = vmatpush1.bf16.msra.mxu0 0
    %392 = vmatprep.subr.bf16.mxu0 0
    %393 = vmatpush1.bf16.msra.mxu0 0
    %394 = vmatprep.subr.bf16.mxu0 0
    %395 = vmatpush1.bf16.msra.mxu0 0
    %396 = vmatprep.subr.bf16.mxu0 0
    %397 = vmatpush1.bf16.msra.mxu0 0
    %398 = vmatprep.subr.bf16.mxu0 0
    %399 = vmatpush1.bf16.msra.mxu0 0
    %400 = vmatprep.subr.bf16.mxu0 0
    %401 = vmatpush1.bf16.msra.mxu0 0
    %402 = vmatprep.subr.bf16.mxu0 0
    %403 = vmatpush1.bf16.msra.mxu0 0
    %404 = vmatprep.subr.bf16.mxu0 0
    %405 = vmatpush1.bf16.msra.mxu0 0
    %406 = vmatprep.subr.bf16.mxu0 0
    %407 = vmatpush1.bf16.msra.mxu0 0
    %408 = vmatprep.subr.bf16.mxu0 0
    %409 = vmatpush1.bf16.msra.mxu0 0
    %410 = vmatprep.subr.bf16.mxu0 0
    %411 = vmatpush1.bf16.msra.mxu0 0
    %412 = vmatprep.subr.bf16.mxu0 0
    %413 = vmatpush1.bf16.msra.mxu0 0
    %414 = vmatprep.subr.bf16.mxu0 0
    %415 = vmatpush1.bf16.msra.mxu0 0
    %416 = vmatprep.mubr.bf16.mxu0 0
    %417 = vmatmul.mubr.bf16.gmra.mrb[0].mxu0 %v382
    %v418 = vpop.f32.mrb[0].mxu0
    %v419 = vadd.f32 %v295, %v418
    %v420 = vpop.f32.mrb[0].mxu0
    %v421 = vpop.f32.mrb[0].mxu0
    %v422 = vpop.f32.mrb[0].mxu0
    %423 = vdwg.mxu0
    %v425 = vrot.slane %v419, 6
    %v427 = vadd.f32 %v186, %v425
    %v428 = vxor.u32 %v427, 2147483648
    %v429 = vmul.f32 %v428, 1.442695
    %v430 = vpow.pop %v429
    %v431 = vadd.f32 %v430, 1.0
    %v432 = vrcp.pop %v431
    %v433 = vmul.f32 1.0, %v432
    %434 = vrot.lane.b32.xlu0 %v425, 64
    %v435 = vpop.permute.xlu0 %434
    %v437 = vmul.f32 %v433, %v435
    %439 = vrot.lane.b32.xlu0 %v437, 64
    %v440 = vpop.permute.xlu0 %439
    %v442 = vadd.f32 %v186, %v440
    %v443 = vtanh.pop %v442
    %v444 = vsub.f32 1.0, %v433
    %446 = vrot.lane.b32.xlu0 %v443, 96
    %v447 = vpop.permute.xlu0 %446
    %v449 = vmul.f32 %v444, %v447
    %v451 = vrot.slane %v376, 6
    %v453 = vmul.f32 %v433, %v451
    %v454 = vadd.f32 %v449, %v453
    %v455 = vpack.c.bf16 %v454, %v454
    %v457 = vrot.slane %v455, 1
    %458 = vrot.lane.b32.xlu0 %v457, 96
    %v459 = vpop.permute.xlu0 %458
    %v461 = vsel %vm147, %v459, 0
    %463 = vmatprep.subr.bf16.mxu0 0
    %464 = vmatpush1.bf16.msra.mxu0 %v304
    %465 = vmatprep.subr.bf16.mxu0 0
    %466 = vmatpush1.bf16.msra.mxu0 %v305
    %467 = vmatprep.subr.bf16.mxu0 0
    %468 = vmatpush1.bf16.msra.mxu0 0
    %469 = vmatprep.subr.bf16.mxu0 0
    %470 = vmatpush1.bf16.msra.mxu0 0
    %471 = vmatprep.subr.bf16.mxu0 0
    %472 = vmatpush1.bf16.msra.mxu0 0
    %473 = vmatprep.subr.bf16.mxu0 0
    %474 = vmatpush1.bf16.msra.mxu0 0
    %475 = vmatprep.subr.bf16.mxu0 0
    %476 = vmatpush1.bf16.msra.mxu0 0
    %477 = vmatprep.subr.bf16.mxu0 0
    %478 = vmatpush1.bf16.msra.mxu0 0
    %479 = vmatprep.subr.bf16.mxu0 0
    %480 = vmatpush1.bf16.msra.mxu0 0
    %481 = vmatprep.subr.bf16.mxu0 0
    %482 = vmatpush1.bf16.msra.mxu0 0
    %483 = vmatprep.subr.bf16.mxu0 0
    %484 = vmatpush1.bf16.msra.mxu0 0
    %485 = vmatprep.subr.bf16.mxu0 0
    %486 = vmatpush1.bf16.msra.mxu0 0
    %487 = vmatprep.subr.bf16.mxu0 0
    %488 = vmatpush1.bf16.msra.mxu0 0
    %489 = vmatprep.subr.bf16.mxu0 0
    %490 = vmatpush1.bf16.msra.mxu0 0
    %491 = vmatprep.subr.bf16.mxu0 0
    %492 = vmatpush1.bf16.msra.mxu0 0
    %493 = vmatprep.subr.bf16.mxu0 0
    %494 = vmatpush1.bf16.msra.mxu0 0
    %495 = vmatprep.mubr.bf16.mxu0 0
    %496 = vmatmul.mubr.bf16.gmra.mrb[0].mxu0 %v461
    %v497 = vpop.f32.mrb[0].mxu0
    %v498 = vadd.f32 %v295, %v497
    %v499 = vpop.f32.mrb[0].mxu0
    %v500 = vpop.f32.mrb[0].mxu0
    %v501 = vpop.f32.mrb[0].mxu0
    %502 = vdwg.mxu0
    %v504 = vrot.slane %v498, 4
    %v506 = vadd.f32 %v186, %v504
    %v507 = vxor.u32 %v506, 2147483648
    %v508 = vmul.f32 %v507, 1.442695
    %v509 = vpow.pop %v508
    %v510 = vadd.f32 %v509, 1.0
    %v511 = vrcp.pop %v510
    %v512 = vmul.f32 1.0, %v511
    %513 = vrot.lane.b32.xlu0 %v504, 64
    %v514 = vpop.permute.xlu0 %513
    %v516 = vmul.f32 %v512, %v514
    %518 = vrot.lane.b32.xlu0 %v516, 64
    %v519 = vpop.permute.xlu0 %518
    %v521 = vadd.f32 %v186, %v519
    %v522 = vtanh.pop %v521
    %v523 = vsub.f32 1.0, %v512
    %525 = vrot.lane.b32.xlu0 %v522, 96
    %v526 = vpop.permute.xlu0 %525
    %v528 = vmul.f32 %v523, %v526
    %v530 = vrot.slane %v454, 6
    %v532 = vmul.f32 %v512, %v530
    %v533 = vadd.f32 %v528, %v532
    %v534 = vpack.c.bf16 %v533, %v533
    %v536 = vrot.slane %v534, 2
    %537 = vrot.lane.b32.xlu0 %v536, 96
    %v538 = vpop.permute.xlu0 %537
    %v540 = vsel %vm147, %v538, 0
    %542 = vmatprep.subr.bf16.mxu0 0
    %543 = vmatpush1.bf16.msra.mxu0 %v304
    %544 = vmatprep.subr.bf16.mxu0 0
    %545 = vmatpush1.bf16.msra.mxu0 %v305
    %546 = vmatprep.subr.bf16.mxu0 0
    %547 = vmatpush1.bf16.msra.mxu0 0
    %548 = vmatprep.subr.bf16.mxu0 0
    %549 = vmatpush1.bf16.msra.mxu0 0
    %550 = vmatprep.subr.bf16.mxu0 0
    %551 = vmatpush1.bf16.msra.mxu0 0
    %552 = vmatprep.subr.bf16.mxu0 0
    %553 = vmatpush1.bf16.msra.mxu0 0
    %554 = vmatprep.subr.bf16.mxu0 0
    %555 = vmatpush1.bf16.msra.mxu0 0
    %556 = vmatprep.subr.bf16.mxu0 0
    %557 = vmatpush1.bf16.msra.mxu0 0
    %558 = vmatprep.subr.bf16.mxu0 0
    %559 = vmatpush1.bf16.msra.mxu0 0
    %560 = vmatprep.subr.bf16.mxu0 0
    %561 = vmatpush1.bf16.msra.mxu0 0
    %562 = vmatprep.subr.bf16.mxu0 0
    %563 = vmatpush1.bf16.msra.mxu0 0
    %564 = vmatprep.subr.bf16.mxu0 0
    %565 = vmatpush1.bf16.msra.mxu0 0
    %566 = vmatprep.subr.bf16.mxu0 0
    %567 = vmatpush1.bf16.msra.mxu0 0
    %568 = vmatprep.subr.bf16.mxu0 0
    %569 = vmatpush1.bf16.msra.mxu0 0
    %570 = vmatprep.subr.bf16.mxu0 0
    %571 = vmatpush1.bf16.msra.mxu0 0
    %572 = vmatprep.subr.bf16.mxu0 0
    %573 = vmatpush1.bf16.msra.mxu0 0
    %574 = vmatprep.mubr.bf16.mxu0 0
    %575 = vmatmul.mubr.bf16.gmra.mrb[0].mxu0 %v540
    %v576 = vpop.f32.mrb[0].mxu0
    %v577 = vadd.f32 %v295, %v576
    %v578 = vpop.f32.mrb[0].mxu0
    %v579 = vpop.f32.mrb[0].mxu0
    %v580 = vpop.f32.mrb[0].mxu0
    %581 = vdwg.mxu0
    %v583 = vrot.slane %v577, 2
    %v585 = vadd.f32 %v186, %v583
    %v586 = vxor.u32 %v585, 2147483648
    %v587 = vmul.f32 %v586, 1.442695
    %v588 = vpow.pop %v587
    %v589 = vadd.f32 %v588, 1.0
    %v590 = vrcp.pop %v589
    %v591 = vmul.f32 1.0, %v590
    %592 = vrot.lane.b32.xlu0 %v583, 64
    %v593 = vpop.permute.xlu0 %592
    %v595 = vmul.f32 %v591, %v593
    %597 = vrot.lane.b32.xlu0 %v595, 64
    %v598 = vpop.permute.xlu0 %597
    %v600 = vadd.f32 %v186, %v598
    %v601 = vtanh.pop %v600
    %v602 = vsub.f32 1.0, %v591
    %604 = vrot.lane.b32.xlu0 %v601, 96
    %v605 = vpop.permute.xlu0 %604
    %v607 = vmul.f32 %v602, %v605
    %v609 = vrot.slane %v533, 6
    %v611 = vmul.f32 %v591, %v609
    %v612 = vadd.f32 %v607, %v611
    %v613 = vpack.c.bf16 %v612, %v612
    %v615 = vrot.slane %v613, 3
    %616 = vrot.lane.b32.xlu0 %v615, 96
    %v617 = vpop.permute.xlu0 %616
    %v619 = vsel %vm147, %v617, 0
    %621 = vmatprep.subr.bf16.mxu0 0
    %622 = vmatpush1.bf16.msra.mxu0 %v304
    %623 = vmatprep.subr.bf16.mxu0 0
    %624 = vmatpush1.bf16.msra.mxu0 %v305
    %625 = vmatprep.subr.bf16.mxu0 0
    %626 = vmatpush1.bf16.msra.mxu0 0
    %627 = vmatprep.subr.bf16.mxu0 0
    %628 = vmatpush1.bf16.msra.mxu0 0
    %629 = vmatprep.subr.bf16.mxu0 0
    %630 = vmatpush1.bf16.msra.mxu0 0
    %631 = vmatprep.subr.bf16.mxu0 0
    %632 = vmatpush1.bf16.msra.mxu0 0
    %633 = vmatprep.subr.bf16.mxu0 0
    %634 = vmatpush1.bf16.msra.mxu0 0
    %635 = vmatprep.subr.bf16.mxu0 0
    %636 = vmatpush1.bf16.msra.mxu0 0
    %637 = vmatprep.subr.bf16.mxu0 0
    %638 = vmatpush1.bf16.msra.mxu0 0
    %639 = vmatprep.subr.bf16.mxu0 0
    %640 = vmatpush1.bf16.msra.mxu0 0
    %641 = vmatprep.subr.bf16.mxu0 0
    %642 = vmatpush1.bf16.msra.mxu0 0
    %643 = vmatprep.subr.bf16.mxu0 0
    %644 = vmatpush1.bf16.msra.mxu0 0
    %645 = vmatprep.subr.bf16.mxu0 0
    %646 = vmatpush1.bf16.msra.mxu0 0
    %647 = vmatprep.subr.bf16.mxu0 0
    %648 = vmatpush1.bf16.msra.mxu0 0
    %649 = vmatprep.subr.bf16.mxu0 0
    %650 = vmatpush1.bf16.msra.mxu0 0
    %651 = vmatprep.subr.bf16.mxu0 0
    %652 = vmatpush1.bf16.msra.mxu0 0
    %653 = vmatprep.mubr.bf16.mxu0 0
    %654 = vmatmul.mubr.bf16.gmra.mrb[0].mxu0 %v619
    %v655 = vpop.f32.mrb[0].mxu0
    %v656 = vadd.f32 %v295, %v655
    %v657 = vpop.f32.mrb[0].mxu0
    %v658 = vpop.f32.mrb[0].mxu0
    %v659 = vpop.f32.mrb[0].mxu0
    %660 = vdwg.mxu0
    %v661 = vadd.f32 %v189, %v656
    %v662 = vxor.u32 %v661, 2147483648
    %v663 = vmul.f32 %v662, 1.442695
    %v664 = vpow.pop %v663
    %v665 = vadd.f32 %v664, 1.0
    %v666 = vrcp.pop %v665
    %v667 = vmul.f32 1.0, %v666
    %669 = vrot.lane.b32.xlu0 %v656, 64
    %v670 = vpop.permute.xlu0 %669
    %v672 = vmul.f32 %v667, %v670
    %674 = vrot.lane.b32.xlu0 %v672, 64
    %v675 = vpop.permute.xlu0 %674
    %v677 = vadd.f32 %v189, %v675
    %v678 = vtanh.pop %v677
    %v679 = vsub.f32 1.0, %v667
    %681 = vrot.lane.b32.xlu0 %v678, 96
    %v682 = vpop.permute.xlu0 %681
    %v684 = vmul.f32 %v679, %v682
    %v686 = vrot.slane %v612, 6
    %v688 = vmul.f32 %v667, %v686
    %v689 = vadd.f32 %v684, %v688
    %v690 = vpack.c.bf16 %v689, %v689
    %692 = vrot.lane.b32.xlu0 %v690, 96
    %v693 = vpop.permute.xlu0 %692
    %v695 = vsel %vm147, %v693, 0
    %697 = vmatprep.subr.bf16.mxu0 0
    %698 = vmatpush1.bf16.msra.mxu0 %v304
    %699 = vmatprep.subr.bf16.mxu0 0
    %700 = vmatpush1.bf16.msra.mxu0 %v305
    %701 = vmatprep.subr.bf16.mxu0 0
    %702 = vmatpush1.bf16.msra.mxu0 0
    %703 = vmatprep.subr.bf16.mxu0 0
    %704 = vmatpush1.bf16.msra.mxu0 0
    %705 = vmatprep.subr.bf16.mxu0 0
    %706 = vmatpush1.bf16.msra.mxu0 0
    %707 = vmatprep.subr.bf16.mxu0 0
    %708 = vmatpush1.bf16.msra.mxu0 0
    %709 = vmatprep.subr.bf16.mxu0 0
    %710 = vmatpush1.bf16.msra.mxu0 0
    %711 = vmatprep.subr.bf16.mxu0 0
    %712 = vmatpush1.bf16.msra.mxu0 0
    %713 = vmatprep.subr.bf16.mxu0 0
    %714 = vmatpush1.bf16.msra.mxu0 0
    %715 = vmatprep.subr.bf16.mxu0 0
    %716 = vmatpush1.bf16.msra.mxu0 0
    %717 = vmatprep.subr.bf16.mxu0 0
    %718 = vmatpush1.bf16.msra.mxu0 0
    %719 = vmatprep.subr.bf16.mxu0 0
    %720 = vmatpush1.bf16.msra.mxu0 0
    %721 = vmatprep.subr.bf16.mxu0 0
    %722 = vmatpush1.bf16.msra.mxu0 0
    %723 = vmatprep.subr.bf16.mxu0 0
    %724 = vmatpush1.bf16.msra.mxu0 0
    %725 = vmatprep.subr.bf16.mxu0 0
    %726 = vmatpush1.bf16.msra.mxu0 0
    %727 = vmatprep.subr.bf16.mxu0 0
    %728 = vmatpush1.bf16.msra.mxu0 0
    %729 = vmatprep.mubr.bf16.mxu0 0
    %730 = vmatmul.mubr.bf16.gmra.mrb[0].mxu0 %v695
    %v731 = vpop.f32.mrb[0].mxu0
    %v732 = vadd.f32 %v295, %v731
    %v733 = vpop.f32.mrb[0].mxu0
    %v734 = vpop.f32.mrb[0].mxu0
    %v735 = vpop.f32.mrb[0].mxu0
    %736 = vdwg.mxu0
    %v738 = vrot.slane %v732, 6
    %v740 = vadd.f32 %v189, %v738
    %v741 = vxor.u32 %v740, 2147483648
    %v742 = vmul.f32 %v741, 1.442695
    %v743 = vpow.pop %v742
    %v744 = vadd.f32 %v743, 1.0
    %v745 = vrcp.pop %v744
    %v746 = vmul.f32 1.0, %v745
    %747 = vrot.lane.b32.xlu0 %v738, 64
    %v748 = vpop.permute.xlu0 %747
    %v750 = vmul.f32 %v746, %v748
    %752 = vrot.lane.b32.xlu0 %v750, 64
    %v753 = vpop.permute.xlu0 %752
    %v755 = vadd.f32 %v189, %v753
    %v756 = vtanh.pop %v755
    %v757 = vsub.f32 1.0, %v746
    %759 = vrot.lane.b32.xlu0 %v756, 96
    %v760 = vpop.permute.xlu0 %759
    %v762 = vmul.f32 %v757, %v760
    %v764 = vrot.slane %v689, 6
    %v766 = vmul.f32 %v746, %v764
    %v767 = vadd.f32 %v762, %v766
    %v768 = vpack.c.bf16 %v767, %v767
    %v770 = vrot.slane %v768, 1
    %771 = vrot.lane.b32.xlu0 %v770, 96
    %v772 = vpop.permute.xlu0 %771
    %v774 = vsel %vm147, %v772, 0
    %776 = vmatprep.subr.bf16.mxu0 0
    %777 = vmatpush1.bf16.msra.mxu0 %v304
    %778 = vmatprep.subr.bf16.mxu0 0
    %779 = vmatpush1.bf16.msra.mxu0 %v305
    %780 = vmatprep.subr.bf16.mxu0 0
    %781 = vmatpush1.bf16.msra.mxu0 0
    %782 = vmatprep.subr.bf16.mxu0 0
    %783 = vmatpush1.bf16.msra.mxu0 0
    %784 = vmatprep.subr.bf16.mxu0 0
    %785 = vmatpush1.bf16.msra.mxu0 0
    %786 = vmatprep.subr.bf16.mxu0 0
    %787 = vmatpush1.bf16.msra.mxu0 0
    %788 = vmatprep.subr.bf16.mxu0 0
    %789 = vmatpush1.bf16.msra.mxu0 0
    %790 = vmatprep.subr.bf16.mxu0 0
    %791 = vmatpush1.bf16.msra.mxu0 0
    %792 = vmatprep.subr.bf16.mxu0 0
    %793 = vmatpush1.bf16.msra.mxu0 0
    %794 = vmatprep.subr.bf16.mxu0 0
    %795 = vmatpush1.bf16.msra.mxu0 0
    %796 = vmatprep.subr.bf16.mxu0 0
    %797 = vmatpush1.bf16.msra.mxu0 0
    %798 = vmatprep.subr.bf16.mxu0 0
    %799 = vmatpush1.bf16.msra.mxu0 0
    %800 = vmatprep.subr.bf16.mxu0 0
    %801 = vmatpush1.bf16.msra.mxu0 0
    %802 = vmatprep.subr.bf16.mxu0 0
    %803 = vmatpush1.bf16.msra.mxu0 0
    %804 = vmatprep.subr.bf16.mxu0 0
    %805 = vmatpush1.bf16.msra.mxu0 0
    %806 = vmatprep.subr.bf16.mxu0 0
    %807 = vmatpush1.bf16.msra.mxu0 0
    %808 = vmatprep.mubr.bf16.mxu0 0
    %809 = vmatmul.mubr.bf16.gmra.mrb[0].mxu0 %v774
    %v810 = vpop.f32.mrb[0].mxu0
    %v811 = vadd.f32 %v295, %v810
    %v812 = vpop.f32.mrb[0].mxu0
    %v813 = vpop.f32.mrb[0].mxu0
    %v814 = vpop.f32.mrb[0].mxu0
    %815 = vdwg.mxu0
    %v817 = vrot.slane %v811, 4
    %v819 = vadd.f32 %v189, %v817
    %v820 = vxor.u32 %v819, 2147483648
    %v821 = vmul.f32 %v820, 1.442695
    %v822 = vpow.pop %v821
    %v823 = vadd.f32 %v822, 1.0
    %v824 = vrcp.pop %v823
    %v825 = vmul.f32 1.0, %v824
    %826 = vrot.lane.b32.xlu0 %v817, 64
    %v827 = vpop.permute.xlu0 %826
    %v829 = vmul.f32 %v825, %v827
    %831 = vrot.lane.b32.xlu0 %v829, 64
    %v832 = vpop.permute.xlu0 %831
    %v834 = vadd.f32 %v189, %v832
    %v835 = vtanh.pop %v834
    %v836 = vsub.f32 1.0, %v825
    %838 = vrot.lane.b32.xlu0 %v835, 96
    %v839 = vpop.permute.xlu0 %838
    %v841 = vmul.f32 %v836, %v839
    %v843 = vrot.slane %v767, 6
    %v845 = vmul.f32 %v825, %v843
    %v846 = vadd.f32 %v841, %v845
    %v847 = vpack.c.bf16 %v846, %v846
    %v849 = vrot.slane %v847, 2
    %850 = vrot.lane.b32.xlu0 %v849, 96
    %v851 = vpop.permute.xlu0 %850
    %v853 = vsel %vm147, %v851, 0
    %855 = vmatprep.subr.bf16.mxu0 0
    %856 = vmatpush1.bf16.msra.mxu0 %v304
    %857 = vmatprep.subr.bf16.mxu0 0
    %858 = vmatpush1.bf16.msra.mxu0 %v305
    %859 = vmatprep.subr.bf16.mxu0 0
    %860 = vmatpush1.bf16.msra.mxu0 0
    %861 = vmatprep.subr.bf16.mxu0 0
    %862 = vmatpush1.bf16.msra.mxu0 0
    %863 = vmatprep.subr.bf16.mxu0 0
    %864 = vmatpush1.bf16.msra.mxu0 0
    %865 = vmatprep.subr.bf16.mxu0 0
    %866 = vmatpush1.bf16.msra.mxu0 0
    %867 = vmatprep.subr.bf16.mxu0 0
    %868 = vmatpush1.bf16.msra.mxu0 0
    %869 = vmatprep.subr.bf16.mxu0 0
    %870 = vmatpush1.bf16.msra.mxu0 0
    %871 = vmatprep.subr.bf16.mxu0 0
    %872 = vmatpush1.bf16.msra.mxu0 0
    %873 = vmatprep.subr.bf16.mxu0 0
    %874 = vmatpush1.bf16.msra.mxu0 0
    %875 = vmatprep.subr.bf16.mxu0 0
    %876 = vmatpush1.bf16.msra.mxu0 0
    %877 = vmatprep.subr.bf16.mxu0 0
    %878 = vmatpush1.bf16.msra.mxu0 0
    %879 = vmatprep.subr.bf16.mxu0 0
    %880 = vmatpush1.bf16.msra.mxu0 0
    %881 = vmatprep.subr.bf16.mxu0 0
    %882 = vmatpush1.bf16.msra.mxu0 0
    %883 = vmatprep.subr.bf16.mxu0 0
    %884 = vmatpush1.bf16.msra.mxu0 0
    %885 = vmatprep.subr.bf16.mxu0 0
    %886 = vmatpush1.bf16.msra.mxu0 0
    %887 = vmatprep.mubr.bf16.mxu0 0
    %888 = vmatmul.mubr.bf16.gmra.mrb[0].mxu0 %v853
    %v889 = vpop.f32.mrb[0].mxu0
    %v890 = vadd.f32 %v295, %v889
    %v891 = vpop.f32.mrb[0].mxu0
    %v892 = vpop.f32.mrb[0].mxu0
    %v893 = vpop.f32.mrb[0].mxu0
    %894 = vdwg.mxu0
    %v896 = vrot.slane %v890, 2
    %v898 = vadd.f32 %v189, %v896
    %v899 = vxor.u32 %v898, 2147483648
    %v900 = vmul.f32 %v899, 1.442695
    %v901 = vpow.pop %v900
    %v902 = vadd.f32 %v901, 1.0
    %v903 = vrcp.pop %v902
    %v904 = vmul.f32 1.0, %v903
    %905 = vrot.lane.b32.xlu0 %v896, 64
    %v906 = vpop.permute.xlu0 %905
    %v908 = vmul.f32 %v904, %v906
    %910 = vrot.lane.b32.xlu0 %v908, 64
    %v911 = vpop.permute.xlu0 %910
    %v913 = vadd.f32 %v189, %v911
    %v914 = vtanh.pop %v913
    %v915 = vsub.f32 1.0, %v904
    %917 = vrot.lane.b32.xlu0 %v914, 96
    %v918 = vpop.permute.xlu0 %917
    %v920 = vmul.f32 %v915, %v918
    %v922 = vrot.slane %v846, 6
    %v924 = vmul.f32 %v904, %v922
    %v925 = vadd.f32 %v920, %v924
    %v926 = vpack.c.bf16 %v925, %v925
    %v927 = vld [vmem:[#allocation2 + $0x70] sm:$0xf]
    %v928 = vld [vmem:[#allocation2 + $0x78] sm:$0xf]
    %v929 = vld [vmem:[#allocation2 + $0x80] sm:$0xf]
    %v930 = vld [vmem:[#allocation2 + $0x88] sm:$0xf]
    %v932 = vrot.slane %v926, 3
    %933 = vrot.lane.b32.xlu0 %v932, 96
    %v934 = vpop.permute.xlu0 %933
    %v939 = vunpack.c.l.b16 %v927
    %v940 = vunpack.c.l.b16 %v928
    %v941 = vunpack.c.l.b16 %v929
    %v942 = vunpack.c.l.b16 %v930
    %v943 = vpack.c.b16 %v940, %v939
    %v944 = vpack.c.b16 %v942, %v941
    %v948 = vsel %vm147, %v934, 0
    %950 = vmatprep.subr.bf16.mxu0 0
    %951 = vmatpush1.bf16.msra.mxu0 %v943
    %952 = vmatprep.subr.bf16.mxu0 0
    %953 = vmatpush1.bf16.msra.mxu0 %v944
    %954 = vmatprep.subr.bf16.mxu0 0
    %955 = vmatpush1.bf16.msra.mxu0 0
    %956 = vmatprep.subr.bf16.mxu0 0
    %957 = vmatpush1.bf16.msra.mxu0 0
    %958 = vmatprep.subr.bf16.mxu0 0
    %959 = vmatpush1.bf16.msra.mxu0 0
    %960 = vmatprep.subr.bf16.mxu0 0
    %961 = vmatpush1.bf16.msra.mxu0 0
    %962 = vmatprep.subr.bf16.mxu0 0
    %963 = vmatpush1.bf16.msra.mxu0 0
    %964 = vmatprep.subr.bf16.mxu0 0
    %965 = vmatpush1.bf16.msra.mxu0 0
    %966 = vmatprep.subr.bf16.mxu0 0
    %967 = vmatpush1.bf16.msra.mxu0 0
    %968 = vmatprep.subr.bf16.mxu0 0
    %969 = vmatpush1.bf16.msra.mxu0 0
    %970 = vmatprep.subr.bf16.mxu0 0
    %971 = vmatpush1.bf16.msra.mxu0 0
    %972 = vmatprep.subr.bf16.mxu0 0
    %973 = vmatpush1.bf16.msra.mxu0 0
    %974 = vmatprep.subr.bf16.mxu0 0
    %975 = vmatpush1.bf16.msra.mxu0 0
    %976 = vmatprep.subr.bf16.mxu0 0
    %977 = vmatpush1.bf16.msra.mxu0 0
    %978 = vmatprep.subr.bf16.mxu0 0
    %979 = vmatpush1.bf16.msra.mxu0 0
    %980 = vmatprep.subr.bf16.mxu0 0
    %981 = vmatpush1.bf16.msra.mxu0 0
    %982 = vmatprep.mubr.bf16.mxu0 0
    %983 = vmatmul.mubr.bf16.gmra.mrb[0].mxu0 %v948
    %v984 = vpop.f32.mrb[0].mxu0
    %v985 = vadd.f32 0.0, %v984
    %v986 = vpop.f32.mrb[0].mxu0
    %v987 = vpop.f32.mrb[0].mxu0
    %v988 = vpop.f32.mrb[0].mxu0
    %989 = vdwg.mxu0
    %v990 = vadd.f32 %v286, %v985
    %vm991 = vcmask 58368
    %992 = vst.msk [vmem:[#allocation5] sm:$0x3] %vm991, %v990
    // Predicated region
    $region18: #{cnn_bigru_forward.1} parent=1 // pred_check
      _
    $region19: #{cnn_bigru_forward.1} parent=1 // pred_check_branch
      %994 = sbr.rel (0) target = $region21
    $region20: #{cnn_bigru_forward.1} parent=1 // pred_region
      %s996 = ssub.s32 32, 32
      %997 = vsyncadd [#allocation4], %s996
      %s999 = sshll.u32 [#allocation5], 4
      %s1000 = int_to_ptr.vmem [resolvable:$true] %s999
      %1002 = dma.vmem_to_hbm [thread:$0]  %s1000, 32, %s3, [#allocation4]
    $region21: #{cnn_bigru_forward.1} parent=1 // pred_fallthru
      _
    // Predicated region
    $region22: #{cnn_bigru_forward.1} parent=1 // pred_check
      _
    $region23: #{cnn_bigru_forward.1} parent=1 // pred_check_branch
      %1004 = sbr.rel (0) target = $region25
    $region24: #{cnn_bigru_forward.1} parent=1 // pred_region
      %1005 = dma.done [#allocation4], 32
    $region25: #{cnn_bigru_forward.1} parent=1 // pred_fallthru
      _
    %1006 = vsyncpa [#allocation3], 1
    %1007 = vsyncpa [#allocation4], 1

</llo_original>
